<compile_context>
chip_gen: v5e
topology: v5e:2x2
jax: 0.10.0
libtpu: 0.0.40
codegen_flags: <defaults>
</compile_context>

<pallas_src>
import math

import jax
import jax.numpy as jnp
from jax import lax
from jax.experimental import pallas as pl
from jax.experimental.pallas import tpu as pltpu

# ---------------- config (small synthetic BERT) ----------------
VOCAB = 100
TYPE_VOCAB = 2
MAX_POS = 32
B, S, D = 2, 8, 32          # batch, seq, hidden
H = 2                       # attention heads
DH = D // H                 # head dim
D_FF = 64                   # intermediate size
N_LAYERS = 2
LN_EPS = 1e-12              # BERT LayerNorm eps


# ---------------- in-kernel helpers (traced inside the Pallas body) ----------------
def _layernorm(x, g, b):
    """Row-wise LayerNorm in f32.  x:(M,D)  g,b:(1,D)."""
    mean = jnp.mean(x, axis=-1, keepdims=True)
    var = jnp.mean(jnp.square(x - mean), axis=-1, keepdims=True)
    inv = lax.rsqrt(var + LN_EPS)
    return (x - mean) * inv * g + b


def _gelu(x):
    # TODO(synk): original BERT uses exact erf-GELU; tanh approximation used here.
    c = math.sqrt(2.0 / math.pi)
    return 0.5 * x * (1.0 + jnp.tanh(c * (x + 0.044715 * x * x * x)))


def _mm(x, w):
    """bf16 MXU matmul with f32 accumulation."""
    return jnp.dot(x.astype(jnp.bfloat16), w, preferred_element_type=jnp.float32)


# ---------------- fused Pallas kernel: full encoder stack + pooler ----------------
def _bert_fused_kernel(emb_ref, bias_ref, eg_ref, eb_ref,
                       wqkv_ref, bqkv_ref, wo_ref, bo_ref,
                       ln1g_ref, ln1b_ref,
                       wi_ref, bi_ref, wf_ref, bf_ref,
                       ln2g_ref, ln2b_ref,
                       poolw_ref, poolb_ref,
                       out_ref):
    """One grid program handles one batch element end-to-end.

    Blocks: emb (1,S,D), bias (1,1,S); per-layer weights stacked along a
    leading L axis and indexed with a static Python loop (weights are fetched
    once and stay in VMEM across the whole kernel).
    """
    x = emb_ref[0]                                   # (S, D) f32
    x = _layernorm(x, eg_ref[...], eb_ref[...])      # embedding LayerNorm
    bias = bias_ref[0]                               # (1, S) additive key mask

    for l in range(N_LAYERS):                        # static unroll over layers
        # -- fused Q|K|V projection: one (S,D) @ (D,3D) matmul --
        # (1/sqrt(DH) attention scale is pre-folded into the Q columns.)
        qkv = _mm(x, wqkv_ref[l]) + bqkv_ref[l]      # (S, 3D) f32

        # -- multi-head self-attention (heads sliced in-kernel, static unroll) --
        ctx_heads = []
        for h in range(H):
            qh = qkv[:, h * DH:(h + 1) * DH].astype(jnp.bfloat16)           # (S, DH)
            kh = qkv[:, D + h * DH:D + (h + 1) * DH].astype(jnp.bfloat16)   # (S, DH)
            vh = qkv[:, 2 * D + h * DH:2 * D + (h + 1) * DH].astype(jnp.bfloat16)
            # scores = q @ k^T without materializing a transpose
            s = lax.dot_general(qh, kh, (((1,), (1,)), ((), ())),
                                preferred_element_type=jnp.float32)
            s = s + bias                                                    # (S, S) f32
            m = jnp.max(s, axis=-1, keepdims=True)                          # stable softmax
            p = jnp.exp(s - m)
            denom = jnp.sum(p, axis=-1, keepdims=True)
            p = p * pl.reciprocal(denom, approx=True)                       # EUP, frees VALU
            ctx_heads.append(jnp.dot(p.astype(jnp.bfloat16), vh,
                                     preferred_element_type=jnp.float32))   # (S, DH)
        ctx = jnp.concatenate(ctx_heads, axis=-1)                           # (S, D) f32

        # -- output projection + residual + LN1 (fused epilogue) --
        attn_out = _mm(ctx, wo_ref[l]) + bo_ref[l]
        x = _layernorm(attn_out + x, ln1g_ref[l], ln1b_ref[l])

        # -- FFN: GELU + residual + LN2 (fused epilogue) --
        inter = _gelu(_mm(x, wi_ref[l]) + bi_ref[l])                        # (S, D_FF) f32
        ff = _mm(inter, wf_ref[l]) + bf_ref[l]
        x = _layernorm(ff + x, ln2g_ref[l], ln2b_ref[l])

    # -- pooler on the [CLS] token --
    cls = x[0:1, :]                                                         # (1, D)
    pooled = jnp.tanh(_mm(cls, poolw_ref[...]) + poolb_ref[...])
    out_ref[...] = pooled[None].astype(out_ref.dtype)                       # (1, 1, D)


# ---------------- parameter initialization (deterministic, synthetic) ----------------
def init_params(key):
    def nrm(k, shape, scale=0.02):
        return scale * jax.random.normal(k, shape, dtype=jnp.float32)

    keys = iter(jax.random.split(key, 4 + N_LAYERS * 6 + 1))
    params = {
        "word_emb": nrm(next(keys), (VOCAB, D)),
        "pos_emb": nrm(next(keys), (MAX_POS, D)),
        "tok_emb": nrm(next(keys), (TYPE_VOCAB, D)),
        "emb_ln_g": jnp.ones((D,), jnp.float32),
        "emb_ln_b": jnp.zeros((D,), jnp.float32),
        "layers": [],
        "pool_w": nrm(next(keys), (D, D)),
        "pool_b": jnp.zeros((D,), jnp.float32),
    }
    for _ in range(N_LAYERS):
        params["layers"].append({
            "wq": nrm(next(keys), (D, D)), "bq": jnp.zeros((D,), jnp.float32),
            "wk": nrm(next(keys), (D, D)), "bk": jnp.zeros((D,), jnp.float32),
            "wv": nrm(next(keys), (D, D)), "bv": jnp.zeros((D,), jnp.float32),
            "wo": nrm(next(keys), (D, D)), "bo": jnp.zeros((D,), jnp.float32),
            "ln1_g": jnp.ones((D,), jnp.float32), "ln1_b": jnp.zeros((D,), jnp.float32),
            "wi": nrm(next(keys), (D, D_FF)), "bi": jnp.zeros((D_FF,), jnp.float32),
            "wf": nrm(next(keys), (D_FF, D)), "bf": jnp.zeros((D,), jnp.float32),
            "ln2_g": jnp.ones((D,), jnp.float32), "ln2_b": jnp.zeros((D,), jnp.float32),
        })
    return params


# ---------------- forward pass: embedding gathers in XLA, everything else fused ----------------
def bert_encoder_forward(params, txt, mask, segment):
    bf16 = jnp.bfloat16
    L = N_LAYERS
    layers = params["layers"]
    scale = 1.0 / math.sqrt(DH)

    # Embedding lookups (gathers) stay in XLA glue.
    positions = jnp.arange(S)
    emb = (jnp.take(params["word_emb"], txt, axis=0)
           + jnp.take(params["pos_emb"], positions, axis=0)[None, :, :]
           + jnp.take(params["tok_emb"], segment, axis=0))                  # (B, S, D) f32

    # Additive attention mask bias, matching BERT's (1 - mask) * -10000.
    bias = (1.0 - mask.astype(jnp.float32))[:, None, :] * -10000.0          # (B, 1, S)

    # Stack per-layer weights along a leading L axis; matmul weights -> bf16.
    # Fold the 1/sqrt(DH) attention scale into the Q projection (one-time prep).
    wqkv = jnp.stack([jnp.concatenate([lp["wq"] * scale, lp["wk"], lp["wv"]], axis=1)
                      for lp in layers]).astype(bf16)                       # (L, D, 3D)
    bqkv = jnp.stack([jnp.concatenate([lp["bq"] * scale, lp["bk"], lp["bv"]])[None, :]
                      for lp in layers])                                    # (L, 1, 3D)
    wo = jnp.stack([lp["wo"] for lp in layers]).astype(bf16)                # (L, D, D)
    bo = jnp.stack([lp["bo"][None, :] for lp in layers])                    # (L, 1, D)
    ln1g = jnp.stack([lp["ln1_g"][None, :] for lp in layers])
    ln1b = jnp.stack([lp["ln1_b"][None, :] for lp in layers])
    wi = jnp.stack([lp["wi"] for lp in layers]).astype(bf16)                # (L, D, D_FF)
    bi = jnp.stack([lp["bi"][None, :] for lp in layers])                    # (L, 1, D_FF)
    wf = jnp.stack([lp["wf"] for lp in layers]).astype(bf16)                # (L, D_FF, D)
    bfb = jnp.stack([lp["bf"][None, :] for lp in layers])                   # (L, 1, D)
    ln2g = jnp.stack([lp["ln2_g"][None, :] for lp in layers])
    ln2b = jnp.stack([lp["ln2_b"][None, :] for lp in layers])

    eg = params["emb_ln_g"].reshape(1, D)
    eb = params["emb_ln_b"].reshape(1, D)
    poolw = params["pool_w"].astype(bf16)                                   # (D, D)
    poolb = params["pool_b"].reshape(1, D)

    batch3 = lambda b: (b, 0, 0)
    shared2 = lambda b: (0, 0)
    shared3 = lambda b: (0, 0, 0)

    pooled = pl.pallas_call(
        _bert_fused_kernel,
        out_shape=jax.ShapeDtypeStruct((B, 1, D), jnp.float32),
        grid=(B,),
        in_specs=[
            pl.BlockSpec((1, S, D), batch3),          # emb
            pl.BlockSpec((1, 1, S), batch3),          # attention mask bias
            pl.BlockSpec((1, D), shared2),            # emb LN gamma
            pl.BlockSpec((1, D), shared2),            # emb LN beta
            pl.BlockSpec((L, D, 3 * D), shared3),     # wqkv (bf16, Q pre-scaled)
            pl.BlockSpec((L, 1, 3 * D), shared3),     # bqkv
            pl.BlockSpec((L, D, D), shared3),         # wo (bf16)
            pl.BlockSpec((L, 1, D), shared3),         # bo
            pl.BlockSpec((L, 1, D), shared3),         # ln1 gamma
            pl.BlockSpec((L, 1, D), shared3),         # ln1 beta
            pl.BlockSpec((L, D, D_FF), shared3),      # wi (bf16)
            pl.BlockSpec((L, 1, D_FF), shared3),      # bi
            pl.BlockSpec((L, D_FF, D), shared3),      # wf (bf16)
            pl.BlockSpec((L, 1, D), shared3),         # bf
            pl.BlockSpec((L, 1, D), shared3),         # ln2 gamma
            pl.BlockSpec((L, 1, D), shared3),         # ln2 beta
            pl.BlockSpec((D, D), shared2),            # pool_w (bf16)
            pl.BlockSpec((1, D), shared2),            # pool_b
        ],
        out_specs=pl.BlockSpec((1, 1, D), batch3),
        compiler_params=pltpu.CompilerParams(
            dimension_semantics=("parallel",),        # shard batch across TCs (v7x)
        ),
    )(emb, bias, eg, eb, wqkv, bqkv, wo, bo, ln1g, ln1b,
      wi, bi, wf, bfb, ln2g, ln2b, poolw, poolb)

    return pooled[:, 0, :]                            # (B, D) — the "out" of BertEncoder


# ---------------- pure-JAX (f32) reference for correctness check ----------------
def bert_encoder_reference(params, txt, mask, segment):
    positions = jnp.arange(S)
    x = (jnp.take(params["word_emb"], txt, axis=0)
         + jnp.take(params["pos_emb"], positions, axis=0)[None, :, :]
         + jnp.take(params["tok_emb"], segment, axis=0))                    # (B,S,D)
    x = _layernorm(x, params["emb_ln_g"], params["emb_ln_b"])
    bias = (1.0 - mask.astype(jnp.float32))[:, None, None, :] * -10000.0    # (B,1,1,S)

    for lp in params["layers"]:
        q = x @ lp["wq"] + lp["bq"]
        k = x @ lp["wk"] + lp["bk"]
        v = x @ lp["wv"] + lp["bv"]
        q = q.reshape(B, S, H, DH).transpose(0, 2, 1, 3)
        k = k.reshape(B, S, H, DH).transpose(0, 2, 1, 3)
        v = v.reshape(B, S, H, DH).transpose(0, 2, 1, 3)
        s = jnp.einsum("bhqd,bhkd->bhqk", q, k) / math.sqrt(DH) + bias
        p = jax.nn.softmax(s, axis=-1)
        ctx = jnp.einsum("bhqk,bhkd->bhqd", p, v)
        ctx = ctx.transpose(0, 2, 1, 3).reshape(B, S, D)
        x = _layernorm(ctx @ lp["wo"] + lp["bo"] + x, lp["ln1_g"], lp["ln1_b"])
        inter = _gelu(x @ lp["wi"] + lp["bi"])
        x = _layernorm(inter @ lp["wf"] + lp["bf"] + x, lp["ln2_g"], lp["ln2_b"])

    return jnp.tanh(x[:, 0, :] @ params["pool_w"] + params["pool_b"])       # (B,D)


if __name__ == "__main__":
    key = jax.random.PRNGKey(0)
    k_param, k_txt, k_seg = jax.random.split(key, 3)

    params = init_params(k_param)

    txt = jax.random.randint(k_txt, (B, S), 0, VOCAB, dtype=jnp.int32)
    segment = jax.random.randint(k_seg, (B, S), 0, TYPE_VOCAB, dtype=jnp.int32)
    # attention mask: second example has last 3 positions padded out
    mask = jnp.ones((B, S), dtype=jnp.int32)
    mask = mask.at[1, S - 3:].set(0)

    out = jax.jit(bert_encoder_forward)(params, txt, mask, segment)
    jax.block_until_ready(out)
    assert out.shape == (B, D) and out.dtype == jnp.float32
    assert bool(jnp.all(jnp.isfinite(out)))

    # correctness vs. pure-JAX f32 reference (kernel uses bf16 matmuls -> loose tol)
    ref = bert_encoder_reference(params, txt, mask, segment)
    assert bool(jnp.allclose(out, ref, atol=3e-2, rtol=3e-2)), \
        f"max abs err {float(jnp.max(jnp.abs(out - ref)))}"

    print("KERNEL_OK")
</pallas_src>

<mosaic_0001>
module attributes {stable_mosaic.version = 11 : i64} {
  func.func @_bert_fused_kernel(%arg0: i32, %arg1: memref<1x8x32xf32, #tpu.memory_space<vmem>>, %arg2: memref<1x1x8xf32, #tpu.memory_space<vmem>>, %arg3: memref<1x32xf32, #tpu.memory_space<vmem>>, %arg4: memref<1x32xf32, #tpu.memory_space<vmem>>, %arg5: memref<2x32x96xbf16, #tpu.memory_space<vmem>>, %arg6: memref<2x1x96xf32, #tpu.memory_space<vmem>>, %arg7: memref<2x32x32xbf16, #tpu.memory_space<vmem>>, %arg8: memref<2x1x32xf32, #tpu.memory_space<vmem>>, %arg9: memref<2x1x32xf32, #tpu.memory_space<vmem>>, %arg10: memref<2x1x32xf32, #tpu.memory_space<vmem>>, %arg11: memref<2x32x64xbf16, #tpu.memory_space<vmem>>, %arg12: memref<2x1x64xf32, #tpu.memory_space<vmem>>, %arg13: memref<2x64x32xbf16, #tpu.memory_space<vmem>>, %arg14: memref<2x1x32xf32, #tpu.memory_space<vmem>>, %arg15: memref<2x1x32xf32, #tpu.memory_space<vmem>>, %arg16: memref<2x1x32xf32, #tpu.memory_space<vmem>>, %arg17: memref<32x32xbf16, #tpu.memory_space<vmem>>, %arg18: memref<1x32xf32, #tpu.memory_space<vmem>>, %arg19: memref<1x1x32xf32, #tpu.memory_space<vmem>>) attributes {dimension_semantics = [#tpu.dimension_semantics<parallel>], iteration_bounds = array<i64: 2>, scalar_prefetch = 0 : i64, scratch_operands = 0 : i64, tpu.core_type = #tpu.core_type<tc>, window_params = [{transform_indices = @transform_0, window_bounds = array<i64: 1, 8, 32>}, {transform_indices = @transform_1, window_bounds = array<i64: 1, 1, 8>}, {pipeline_mode = #tpu.pipeline_mode<synchronous>, transform_indices = @transform_2, window_bounds = array<i64: 1, 32>}, {pipeline_mode = #tpu.pipeline_mode<synchronous>, transform_indices = @transform_3, window_bounds = array<i64: 1, 32>}, {pipeline_mode = #tpu.pipeline_mode<synchronous>, transform_indices = @transform_4, window_bounds = array<i64: 2, 32, 96>}, {pipeline_mode = #tpu.pipeline_mode<synchronous>, transform_indices = @transform_5, window_bounds = array<i64: 2, 1, 96>}, {pipeline_mode = #tpu.pipeline_mode<synchronous>, transform_indices = @transform_6, window_bounds = array<i64: 2, 32, 32>}, {pipeline_mode = #tpu.pipeline_mode<synchronous>, transform_indices = @transform_7, window_bounds = array<i64: 2, 1, 32>}, {pipeline_mode = #tpu.pipeline_mode<synchronous>, transform_indices = @transform_8, window_bounds = array<i64: 2, 1, 32>}, {pipeline_mode = #tpu.pipeline_mode<synchronous>, transform_indices = @transform_9, window_bounds = array<i64: 2, 1, 32>}, {pipeline_mode = #tpu.pipeline_mode<synchronous>, transform_indices = @transform_10, window_bounds = array<i64: 2, 32, 64>}, {pipeline_mode = #tpu.pipeline_mode<synchronous>, transform_indices = @transform_11, window_bounds = array<i64: 2, 1, 64>}, {pipeline_mode = #tpu.pipeline_mode<synchronous>, transform_indices = @transform_12, window_bounds = array<i64: 2, 64, 32>}, {pipeline_mode = #tpu.pipeline_mode<synchronous>, transform_indices = @transform_13, window_bounds = array<i64: 2, 1, 32>}, {pipeline_mode = #tpu.pipeline_mode<synchronous>, transform_indices = @transform_14, window_bounds = array<i64: 2, 1, 32>}, {pipeline_mode = #tpu.pipeline_mode<synchronous>, transform_indices = @transform_15, window_bounds = array<i64: 2, 1, 32>}, {pipeline_mode = #tpu.pipeline_mode<synchronous>, transform_indices = @transform_16, window_bounds = array<i64: 32, 32>}, {pipeline_mode = #tpu.pipeline_mode<synchronous>, transform_indices = @transform_17, window_bounds = array<i64: 1, 32>}, {transform_indices = @transform_18, window_bounds = array<i64: 1, 1, 32>}]} {
    %c0 = arith.constant 0 : index
    %c0_0 = arith.constant 0 : index
    %c0_1 = arith.constant 0 : index
    %0 = vector.load %arg1[%c0, %c0_0, %c0_1] : memref<1x8x32xf32, #tpu.memory_space<vmem>>, vector<1x8x32xf32>
    %1 = vector.shape_cast %0 : vector<1x8x32xf32> to vector<8x32xf32>
    %c0_2 = arith.constant 0 : index
    %c0_3 = arith.constant 0 : index
    %2 = vector.load %arg3[%c0_2, %c0_3] : memref<1x32xf32, #tpu.memory_space<vmem>>, vector<1x32xf32>
    %c0_4 = arith.constant 0 : index
    %c0_5 = arith.constant 0 : index
    %3 = vector.load %arg4[%c0_4, %c0_5] : memref<1x32xf32, #tpu.memory_space<vmem>>, vector<1x32xf32>
    %cst = arith.constant dense<0.000000e+00> : vector<8xf32>
    %4 = vector.multi_reduction <add>, %1, %cst [1] : vector<8x32xf32> to vector<8xf32>
    %5 = vector.shape_cast %4 : vector<8xf32> to vector<8x1xf32>
    %cst_6 = arith.constant 3.200000e+01 : f32
    %6 = vector.broadcast %cst_6 : f32 to vector<8x1xf32>
    %7 = arith.divf %5, %6 : vector<8x1xf32>
    %8 = vector.broadcast %7 : vector<8x1xf32> to vector<8x32xf32>
    %9 = arith.subf %1, %8 : vector<8x32xf32>
    %10 = arith.mulf %9, %9 : vector<8x32xf32>
    %cst_7 = arith.constant dense<0.000000e+00> : vector<8xf32>
    %11 = vector.multi_reduction <add>, %10, %cst_7 [1] : vector<8x32xf32> to vector<8xf32>
    %12 = vector.shape_cast %11 : vector<8xf32> to vector<8x1xf32>
    %cst_8 = arith.constant 3.200000e+01 : f32
    %13 = vector.broadcast %cst_8 : f32 to vector<8x1xf32>
    %14 = arith.divf %12, %13 : vector<8x1xf32>
    %cst_9 = arith.constant 9.99999996E-13 : f32
    %15 = vector.broadcast %cst_9 : f32 to vector<8x1xf32>
    %16 = arith.addf %14, %15 : vector<8x1xf32>
    %17 = math.rsqrt %16 : vector<8x1xf32>
    %18 = vector.broadcast %7 : vector<8x1xf32> to vector<8x32xf32>
    %19 = arith.subf %1, %18 : vector<8x32xf32>
    %20 = vector.broadcast %17 : vector<8x1xf32> to vector<8x32xf32>
    %21 = arith.mulf %19, %20 : vector<8x32xf32>
    %22 = vector.broadcast %2 : vector<1x32xf32> to vector<8x32xf32>
    %23 = arith.mulf %21, %22 : vector<8x32xf32>
    %24 = vector.broadcast %3 : vector<1x32xf32> to vector<8x32xf32>
    %25 = arith.addf %23, %24 : vector<8x32xf32>
    %c0_10 = arith.constant 0 : index
    %c0_11 = arith.constant 0 : index
    %c0_12 = arith.constant 0 : index
    %26 = vector.load %arg2[%c0_10, %c0_11, %c0_12] : memref<1x1x8xf32, #tpu.memory_space<vmem>>, vector<1x1x8xf32>
    %27 = vector.shape_cast %26 : vector<1x1x8xf32> to vector<1x8xf32>
    %c0_13 = arith.constant 0 : index
    %c0_14 = arith.constant 0 : index
    %c0_15 = arith.constant 0 : index
    %28 = vector.load %arg5[%c0_13, %c0_14, %c0_15] : memref<2x32x96xbf16, #tpu.memory_space<vmem>>, vector<1x32x96xbf16>
    %29 = vector.shape_cast %28 : vector<1x32x96xbf16> to vector<32x96xbf16>
    %30 = arith.truncf %25 : vector<8x32xf32> to vector<8x32xbf16>
    %cst_16 = arith.constant dense<0.000000e+00> : vector<8x96xf32>
    %31 = tpu.matmul %30, %29, %cst_16 {dimension_numbers = #tpu.dot_dimension_numbers<[1], [0], [0], [1], [0, 0, 1, 1], [], []>} : vector<8x32xbf16>, vector<32x96xbf16>, vector<8x96xf32> -> vector<8x96xf32>
    %c0_17 = arith.constant 0 : index
    %c0_18 = arith.constant 0 : index
    %c0_19 = arith.constant 0 : index
    %32 = vector.load %arg6[%c0_17, %c0_18, %c0_19] : memref<2x1x96xf32, #tpu.memory_space<vmem>>, vector<1x1x96xf32>
    %33 = vector.shape_cast %32 : vector<1x1x96xf32> to vector<1x96xf32>
    %34 = vector.broadcast %33 : vector<1x96xf32> to vector<8x96xf32>
    %35 = arith.addf %31, %34 : vector<8x96xf32>
    %36 = vector.extract_strided_slice %35 {offsets = [0, 0], sizes = [8, 16], strides = [1, 1]} : vector<8x96xf32> to vector<8x16xf32>
    %37 = arith.truncf %36 : vector<8x16xf32> to vector<8x16xbf16>
    %38 = vector.extract_strided_slice %35 {offsets = [0, 32], sizes = [8, 16], strides = [1, 1]} : vector<8x96xf32> to vector<8x16xf32>
    %39 = arith.truncf %38 : vector<8x16xf32> to vector<8x16xbf16>
    %40 = vector.extract_strided_slice %35 {offsets = [0, 64], sizes = [8, 16], strides = [1, 1]} : vector<8x96xf32> to vector<8x16xf32>
    %41 = arith.truncf %40 : vector<8x16xf32> to vector<8x16xbf16>
    %cst_20 = arith.constant dense<0.000000e+00> : vector<8x8xf32>
    %42 = tpu.matmul %37, %39, %cst_20 {dimension_numbers = #tpu.dot_dimension_numbers<[1], [1], [0], [0], [0, 0, 1, 0], [], []>} : vector<8x16xbf16>, vector<8x16xbf16>, vector<8x8xf32> -> vector<8x8xf32>
    %43 = vector.broadcast %27 : vector<1x8xf32> to vector<8x8xf32>
    %44 = arith.addf %42, %43 : vector<8x8xf32>
    %cst_21 = arith.constant dense<0xFF800000> : vector<8xf32>
    %45 = vector.multi_reduction <maximumf>, %44, %cst_21 [1] : vector<8x8xf32> to vector<8xf32>
    %46 = vector.shape_cast %45 : vector<8xf32> to vector<8x1xf32>
    %47 = vector.broadcast %46 : vector<8x1xf32> to vector<8x8xf32>
    %48 = arith.subf %44, %47 : vector<8x8xf32>
    %49 = math.exp %48 : vector<8x8xf32>
    %cst_22 = arith.constant dense<0.000000e+00> : vector<8xf32>
    %50 = vector.multi_reduction <add>, %49, %cst_22 [1] : vector<8x8xf32> to vector<8xf32>
    %51 = vector.shape_cast %50 : vector<8xf32> to vector<8x1xf32>
    %52 = tpu.reciprocal %51 {approx = true} : vector<8x1xf32> -> vector<8x1xf32>
    %53 = vector.broadcast %52 : vector<8x1xf32> to vector<8x8xf32>
    %54 = arith.mulf %49, %53 : vector<8x8xf32>
    %55 = arith.truncf %54 : vector<8x8xf32> to vector<8x8xbf16>
    %cst_23 = arith.constant dense<0.000000e+00> : vector<8x16xf32>
    %56 = tpu.matmul %55, %41, %cst_23 {dimension_numbers = #tpu.dot_dimension_numbers<[1], [0], [0], [1], [0, 0, 1, 1], [], []>} : vector<8x8xbf16>, vector<8x16xbf16>, vector<8x16xf32> -> vector<8x16xf32>
    %57 = vector.extract_strided_slice %35 {offsets = [0, 16], sizes = [8, 16], strides = [1, 1]} : vector<8x96xf32> to vector<8x16xf32>
    %58 = arith.truncf %57 : vector<8x16xf32> to vector<8x16xbf16>
    %59 = vector.extract_strided_slice %35 {offsets = [0, 48], sizes = [8, 16], strides = [1, 1]} : vector<8x96xf32> to vector<8x16xf32>
    %60 = arith.truncf %59 : vector<8x16xf32> to vector<8x16xbf16>
    %61 = vector.extract_strided_slice %35 {offsets = [0, 80], sizes = [8, 16], strides = [1, 1]} : vector<8x96xf32> to vector<8x16xf32>
    %62 = arith.truncf %61 : vector<8x16xf32> to vector<8x16xbf16>
    %cst_24 = arith.constant dense<0.000000e+00> : vector<8x8xf32>
    %63 = tpu.matmul %58, %60, %cst_24 {dimension_numbers = #tpu.dot_dimension_numbers<[1], [1], [0], [0], [0, 0, 1, 0], [], []>} : vector<8x16xbf16>, vector<8x16xbf16>, vector<8x8xf32> -> vector<8x8xf32>
    %64 = vector.broadcast %27 : vector<1x8xf32> to vector<8x8xf32>
    %65 = arith.addf %63, %64 : vector<8x8xf32>
    %cst_25 = arith.constant dense<0xFF800000> : vector<8xf32>
    %66 = vector.multi_reduction <maximumf>, %65, %cst_25 [1] : vector<8x8xf32> to vector<8xf32>
    %67 = vector.shape_cast %66 : vector<8xf32> to vector<8x1xf32>
    %68 = vector.broadcast %67 : vector<8x1xf32> to vector<8x8xf32>
    %69 = arith.subf %65, %68 : vector<8x8xf32>
    %70 = math.exp %69 : vector<8x8xf32>
    %cst_26 = arith.constant dense<0.000000e+00> : vector<8xf32>
    %71 = vector.multi_reduction <add>, %70, %cst_26 [1] : vector<8x8xf32> to vector<8xf32>
    %72 = vector.shape_cast %71 : vector<8xf32> to vector<8x1xf32>
    %73 = tpu.reciprocal %72 {approx = true} : vector<8x1xf32> -> vector<8x1xf32>
    %74 = vector.broadcast %73 : vector<8x1xf32> to vector<8x8xf32>
    %75 = arith.mulf %70, %74 : vector<8x8xf32>
    %76 = arith.truncf %75 : vector<8x8xf32> to vector<8x8xbf16>
    %cst_27 = arith.constant dense<0.000000e+00> : vector<8x16xf32>
    %77 = tpu.matmul %76, %62, %cst_27 {dimension_numbers = #tpu.dot_dimension_numbers<[1], [0], [0], [1], [0, 0, 1, 1], [], []>} : vector<8x8xbf16>, vector<8x16xbf16>, vector<8x16xf32> -> vector<8x16xf32>
    %78 = tpu.concatenate %56, %77 in 1 : vector<8x16xf32>, vector<8x16xf32> -> vector<8x32xf32>
    %c0_28 = arith.constant 0 : index
    %c0_29 = arith.constant 0 : index
    %c0_30 = arith.constant 0 : index
    %79 = vector.load %arg7[%c0_28, %c0_29, %c0_30] : memref<2x32x32xbf16, #tpu.memory_space<vmem>>, vector<1x32x32xbf16>
    %80 = vector.shape_cast %79 : vector<1x32x32xbf16> to vector<32x32xbf16>
    %81 = arith.truncf %78 : vector<8x32xf32> to vector<8x32xbf16>
    %cst_31 = arith.constant dense<0.000000e+00> : vector<8x32xf32>
    %82 = tpu.matmul %81, %80, %cst_31 {dimension_numbers = #tpu.dot_dimension_numbers<[1], [0], [0], [1], [0, 0, 1, 1], [], []>} : vector<8x32xbf16>, vector<32x32xbf16>, vector<8x32xf32> -> vector<8x32xf32>
    %c0_32 = arith.constant 0 : index
    %c0_33 = arith.constant 0 : index
    %c0_34 = arith.constant 0 : index
    %83 = vector.load %arg8[%c0_32, %c0_33, %c0_34] : memref<2x1x32xf32, #tpu.memory_space<vmem>>, vector<1x1x32xf32>
    %84 = vector.shape_cast %83 : vector<1x1x32xf32> to vector<1x32xf32>
    %85 = vector.broadcast %84 : vector<1x32xf32> to vector<8x32xf32>
    %86 = arith.addf %82, %85 : vector<8x32xf32>
    %87 = arith.addf %86, %25 : vector<8x32xf32>
    %c0_35 = arith.constant 0 : index
    %c0_36 = arith.constant 0 : index
    %c0_37 = arith.constant 0 : index
    %88 = vector.load %arg9[%c0_35, %c0_36, %c0_37] : memref<2x1x32xf32, #tpu.memory_space<vmem>>, vector<1x1x32xf32>
    %89 = vector.shape_cast %88 : vector<1x1x32xf32> to vector<1x32xf32>
    %c0_38 = arith.constant 0 : index
    %c0_39 = arith.constant 0 : index
    %c0_40 = arith.constant 0 : index
    %90 = vector.load %arg10[%c0_38, %c0_39, %c0_40] : memref<2x1x32xf32, #tpu.memory_space<vmem>>, vector<1x1x32xf32>
    %91 = vector.shape_cast %90 : vector<1x1x32xf32> to vector<1x32xf32>
    %cst_41 = arith.constant dense<0.000000e+00> : vector<8xf32>
    %92 = vector.multi_reduction <add>, %87, %cst_41 [1] : vector<8x32xf32> to vector<8xf32>
    %93 = vector.shape_cast %92 : vector<8xf32> to vector<8x1xf32>
    %cst_42 = arith.constant 3.200000e+01 : f32
    %94 = vector.broadcast %cst_42 : f32 to vector<8x1xf32>
    %95 = arith.divf %93, %94 : vector<8x1xf32>
    %96 = vector.broadcast %95 : vector<8x1xf32> to vector<8x32xf32>
    %97 = arith.subf %87, %96 : vector<8x32xf32>
    %98 = arith.mulf %97, %97 : vector<8x32xf32>
    %cst_43 = arith.constant dense<0.000000e+00> : vector<8xf32>
    %99 = vector.multi_reduction <add>, %98, %cst_43 [1] : vector<8x32xf32> to vector<8xf32>
    %100 = vector.shape_cast %99 : vector<8xf32> to vector<8x1xf32>
    %cst_44 = arith.constant 3.200000e+01 : f32
    %101 = vector.broadcast %cst_44 : f32 to vector<8x1xf32>
    %102 = arith.divf %100, %101 : vector<8x1xf32>
    %cst_45 = arith.constant 9.99999996E-13 : f32
    %103 = vector.broadcast %cst_45 : f32 to vector<8x1xf32>
    %104 = arith.addf %102, %103 : vector<8x1xf32>
    %105 = math.rsqrt %104 : vector<8x1xf32>
    %106 = vector.broadcast %95 : vector<8x1xf32> to vector<8x32xf32>
    %107 = arith.subf %87, %106 : vector<8x32xf32>
    %108 = vector.broadcast %105 : vector<8x1xf32> to vector<8x32xf32>
    %109 = arith.mulf %107, %108 : vector<8x32xf32>
    %110 = vector.broadcast %89 : vector<1x32xf32> to vector<8x32xf32>
    %111 = arith.mulf %109, %110 : vector<8x32xf32>
    %112 = vector.broadcast %91 : vector<1x32xf32> to vector<8x32xf32>
    %113 = arith.addf %111, %112 : vector<8x32xf32>
    %c0_46 = arith.constant 0 : index
    %c0_47 = arith.constant 0 : index
    %c0_48 = arith.constant 0 : index
    %114 = vector.load %arg11[%c0_46, %c0_47, %c0_48] : memref<2x32x64xbf16, #tpu.memory_space<vmem>>, vector<1x32x64xbf16>
    %115 = vector.shape_cast %114 : vector<1x32x64xbf16> to vector<32x64xbf16>
    %116 = arith.truncf %113 : vector<8x32xf32> to vector<8x32xbf16>
    %cst_49 = arith.constant dense<0.000000e+00> : vector<8x64xf32>
    %117 = tpu.matmul %116, %115, %cst_49 {dimension_numbers = #tpu.dot_dimension_numbers<[1], [0], [0], [1], [0, 0, 1, 1], [], []>} : vector<8x32xbf16>, vector<32x64xbf16>, vector<8x64xf32> -> vector<8x64xf32>
    %c0_50 = arith.constant 0 : index
    %c0_51 = arith.constant 0 : index
    %c0_52 = arith.constant 0 : index
    %118 = vector.load %arg12[%c0_50, %c0_51, %c0_52] : memref<2x1x64xf32, #tpu.memory_space<vmem>>, vector<1x1x64xf32>
    %119 = vector.shape_cast %118 : vector<1x1x64xf32> to vector<1x64xf32>
    %120 = vector.broadcast %119 : vector<1x64xf32> to vector<8x64xf32>
    %121 = arith.addf %117, %120 : vector<8x64xf32>
    %cst_53 = arith.constant 5.000000e-01 : f32
    %122 = vector.broadcast %cst_53 : f32 to vector<8x64xf32>
    %123 = arith.mulf %122, %121 : vector<8x64xf32>
    %cst_54 = arith.constant 4.471500e-02 : f32
    %124 = vector.broadcast %cst_54 : f32 to vector<8x64xf32>
    %125 = arith.mulf %124, %121 : vector<8x64xf32>
    %126 = arith.mulf %125, %121 : vector<8x64xf32>
    %127 = arith.mulf %126, %121 : vector<8x64xf32>
    %128 = arith.addf %121, %127 : vector<8x64xf32>
    %cst_55 = arith.constant 0.797884583 : f32
    %129 = vector.broadcast %cst_55 : f32 to vector<8x64xf32>
    %130 = arith.mulf %129, %128 : vector<8x64xf32>
    %131 = math.tanh %130 : vector<8x64xf32>
    %cst_56 = arith.constant 1.000000e+00 : f32
    %132 = vector.broadcast %cst_56 : f32 to vector<8x64xf32>
    %133 = arith.addf %132, %131 : vector<8x64xf32>
    %134 = arith.mulf %123, %133 : vector<8x64xf32>
    %c0_57 = arith.constant 0 : index
    %c0_58 = arith.constant 0 : index
    %c0_59 = arith.constant 0 : index
    %135 = vector.load %arg13[%c0_57, %c0_58, %c0_59] : memref<2x64x32xbf16, #tpu.memory_space<vmem>>, vector<1x64x32xbf16>
    %136 = vector.shape_cast %135 : vector<1x64x32xbf16> to vector<64x32xbf16>
    %137 = arith.truncf %134 : vector<8x64xf32> to vector<8x64xbf16>
    %cst_60 = arith.constant dense<0.000000e+00> : vector<8x32xf32>
    %138 = tpu.matmul %137, %136, %cst_60 {dimension_numbers = #tpu.dot_dimension_numbers<[1], [0], [0], [1], [0, 0, 1, 1], [], []>} : vector<8x64xbf16>, vector<64x32xbf16>, vector<8x32xf32> -> vector<8x32xf32>
    %c0_61 = arith.constant 0 : index
    %c0_62 = arith.constant 0 : index
    %c0_63 = arith.constant 0 : index
    %139 = vector.load %arg14[%c0_61, %c0_62, %c0_63] : memref<2x1x32xf32, #tpu.memory_space<vmem>>, vector<1x1x32xf32>
    %140 = vector.shape_cast %139 : vector<1x1x32xf32> to vector<1x32xf32>
    %141 = vector.broadcast %140 : vector<1x32xf32> to vector<8x32xf32>
    %142 = arith.addf %138, %141 : vector<8x32xf32>
    %143 = arith.addf %142, %113 : vector<8x32xf32>
    %c0_64 = arith.constant 0 : index
    %c0_65 = arith.constant 0 : index
    %c0_66 = arith.constant 0 : index
    %144 = vector.load %arg15[%c0_64, %c0_65, %c0_66] : memref<2x1x32xf32, #tpu.memory_space<vmem>>, vector<1x1x32xf32>
    %145 = vector.shape_cast %144 : vector<1x1x32xf32> to vector<1x32xf32>
    %c0_67 = arith.constant 0 : index
    %c0_68 = arith.constant 0 : index
    %c0_69 = arith.constant 0 : index
    %146 = vector.load %arg16[%c0_67, %c0_68, %c0_69] : memref<2x1x32xf32, #tpu.memory_space<vmem>>, vector<1x1x32xf32>
    %147 = vector.shape_cast %146 : vector<1x1x32xf32> to vector<1x32xf32>
    %cst_70 = arith.constant dense<0.000000e+00> : vector<8xf32>
    %148 = vector.multi_reduction <add>, %143, %cst_70 [1] : vector<8x32xf32> to vector<8xf32>
    %149 = vector.shape_cast %148 : vector<8xf32> to vector<8x1xf32>
    %cst_71 = arith.constant 3.200000e+01 : f32
    %150 = vector.broadcast %cst_71 : f32 to vector<8x1xf32>
    %151 = arith.divf %149, %150 : vector<8x1xf32>
    %152 = vector.broadcast %151 : vector<8x1xf32> to vector<8x32xf32>
    %153 = arith.subf %143, %152 : vector<8x32xf32>
    %154 = arith.mulf %153, %153 : vector<8x32xf32>
    %cst_72 = arith.constant dense<0.000000e+00> : vector<8xf32>
    %155 = vector.multi_reduction <add>, %154, %cst_72 [1] : vector<8x32xf32> to vector<8xf32>
    %156 = vector.shape_cast %155 : vector<8xf32> to vector<8x1xf32>
    %cst_73 = arith.constant 3.200000e+01 : f32
    %157 = vector.broadcast %cst_73 : f32 to vector<8x1xf32>
    %158 = arith.divf %156, %157 : vector<8x1xf32>
    %cst_74 = arith.constant 9.99999996E-13 : f32
    %159 = vector.broadcast %cst_74 : f32 to vector<8x1xf32>
    %160 = arith.addf %158, %159 : vector<8x1xf32>
    %161 = math.rsqrt %160 : vector<8x1xf32>
    %162 = vector.broadcast %151 : vector<8x1xf32> to vector<8x32xf32>
    %163 = arith.subf %143, %162 : vector<8x32xf32>
    %164 = vector.broadcast %161 : vector<8x1xf32> to vector<8x32xf32>
    %165 = arith.mulf %163, %164 : vector<8x32xf32>
    %166 = vector.broadcast %145 : vector<1x32xf32> to vector<8x32xf32>
    %167 = arith.mulf %165, %166 : vector<8x32xf32>
    %168 = vector.broadcast %147 : vector<1x32xf32> to vector<8x32xf32>
    %169 = arith.addf %167, %168 : vector<8x32xf32>
    %c1 = arith.constant 1 : index
    %c0_75 = arith.constant 0 : index
    %c0_76 = arith.constant 0 : index
    %170 = vector.load %arg5[%c1, %c0_75, %c0_76] : memref<2x32x96xbf16, #tpu.memory_space<vmem>>, vector<1x32x96xbf16>
    %171 = vector.shape_cast %170 : vector<1x32x96xbf16> to vector<32x96xbf16>
    %172 = arith.truncf %169 : vector<8x32xf32> to vector<8x32xbf16>
    %cst_77 = arith.constant dense<0.000000e+00> : vector<8x96xf32>
    %173 = tpu.matmul %172, %171, %cst_77 {dimension_numbers = #tpu.dot_dimension_numbers<[1], [0], [0], [1], [0, 0, 1, 1], [], []>} : vector<8x32xbf16>, vector<32x96xbf16>, vector<8x96xf32> -> vector<8x96xf32>
    %c1_78 = arith.constant 1 : index
    %c0_79 = arith.constant 0 : index
    %c0_80 = arith.constant 0 : index
    %174 = vector.load %arg6[%c1_78, %c0_79, %c0_80] : memref<2x1x96xf32, #tpu.memory_space<vmem>>, vector<1x1x96xf32>
    %175 = vector.shape_cast %174 : vector<1x1x96xf32> to vector<1x96xf32>
    %176 = vector.broadcast %175 : vector<1x96xf32> to vector<8x96xf32>
    %177 = arith.addf %173, %176 : vector<8x96xf32>
    %178 = vector.extract_strided_slice %177 {offsets = [0, 0], sizes = [8, 16], strides = [1, 1]} : vector<8x96xf32> to vector<8x16xf32>
    %179 = arith.truncf %178 : vector<8x16xf32> to vector<8x16xbf16>
    %180 = vector.extract_strided_slice %177 {offsets = [0, 32], sizes = [8, 16], strides = [1, 1]} : vector<8x96xf32> to vector<8x16xf32>
    %181 = arith.truncf %180 : vector<8x16xf32> to vector<8x16xbf16>
    %182 = vector.extract_strided_slice %177 {offsets = [0, 64], sizes = [8, 16], strides = [1, 1]} : vector<8x96xf32> to vector<8x16xf32>
    %183 = arith.truncf %182 : vector<8x16xf32> to vector<8x16xbf16>
    %cst_81 = arith.constant dense<0.000000e+00> : vector<8x8xf32>
    %184 = tpu.matmul %179, %181, %cst_81 {dimension_numbers = #tpu.dot_dimension_numbers<[1], [1], [0], [0], [0, 0, 1, 0], [], []>} : vector<8x16xbf16>, vector<8x16xbf16>, vector<8x8xf32> -> vector<8x8xf32>
    %185 = vector.broadcast %27 : vector<1x8xf32> to vector<8x8xf32>
    %186 = arith.addf %184, %185 : vector<8x8xf32>
    %cst_82 = arith.constant dense<0xFF800000> : vector<8xf32>
    %187 = vector.multi_reduction <maximumf>, %186, %cst_82 [1] : vector<8x8xf32> to vector<8xf32>
    %188 = vector.shape_cast %187 : vector<8xf32> to vector<8x1xf32>
    %189 = vector.broadcast %188 : vector<8x1xf32> to vector<8x8xf32>
    %190 = arith.subf %186, %189 : vector<8x8xf32>
    %191 = math.exp %190 : vector<8x8xf32>
    %cst_83 = arith.constant dense<0.000000e+00> : vector<8xf32>
    %192 = vector.multi_reduction <add>, %191, %cst_83 [1] : vector<8x8xf32> to vector<8xf32>
    %193 = vector.shape_cast %192 : vector<8xf32> to vector<8x1xf32>
    %194 = tpu.reciprocal %193 {approx = true} : vector<8x1xf32> -> vector<8x1xf32>
    %195 = vector.broadcast %194 : vector<8x1xf32> to vector<8x8xf32>
    %196 = arith.mulf %191, %195 : vector<8x8xf32>
    %197 = arith.truncf %196 : vector<8x8xf32> to vector<8x8xbf16>
    %cst_84 = arith.constant dense<0.000000e+00> : vector<8x16xf32>
    %198 = tpu.matmul %197, %183, %cst_84 {dimension_numbers = #tpu.dot_dimension_numbers<[1], [0], [0], [1], [0, 0, 1, 1], [], []>} : vector<8x8xbf16>, vector<8x16xbf16>, vector<8x16xf32> -> vector<8x16xf32>
    %199 = vector.extract_strided_slice %177 {offsets = [0, 16], sizes = [8, 16], strides = [1, 1]} : vector<8x96xf32> to vector<8x16xf32>
    %200 = arith.truncf %199 : vector<8x16xf32> to vector<8x16xbf16>
    %201 = vector.extract_strided_slice %177 {offsets = [0, 48], sizes = [8, 16], strides = [1, 1]} : vector<8x96xf32> to vector<8x16xf32>
    %202 = arith.truncf %201 : vector<8x16xf32> to vector<8x16xbf16>
    %203 = vector.extract_strided_slice %177 {offsets = [0, 80], sizes = [8, 16], strides = [1, 1]} : vector<8x96xf32> to vector<8x16xf32>
    %204 = arith.truncf %203 : vector<8x16xf32> to vector<8x16xbf16>
    %cst_85 = arith.constant dense<0.000000e+00> : vector<8x8xf32>
    %205 = tpu.matmul %200, %202, %cst_85 {dimension_numbers = #tpu.dot_dimension_numbers<[1], [1], [0], [0], [0, 0, 1, 0], [], []>} : vector<8x16xbf16>, vector<8x16xbf16>, vector<8x8xf32> -> vector<8x8xf32>
    %206 = vector.broadcast %27 : vector<1x8xf32> to vector<8x8xf32>
    %207 = arith.addf %205, %206 : vector<8x8xf32>
    %cst_86 = arith.constant dense<0xFF800000> : vector<8xf32>
    %208 = vector.multi_reduction <maximumf>, %207, %cst_86 [1] : vector<8x8xf32> to vector<8xf32>
    %209 = vector.shape_cast %208 : vector<8xf32> to vector<8x1xf32>
    %210 = vector.broadcast %209 : vector<8x1xf32> to vector<8x8xf32>
    %211 = arith.subf %207, %210 : vector<8x8xf32>
    %212 = math.exp %211 : vector<8x8xf32>
    %cst_87 = arith.constant dense<0.000000e+00> : vector<8xf32>
    %213 = vector.multi_reduction <add>, %212, %cst_87 [1] : vector<8x8xf32> to vector<8xf32>
    %214 = vector.shape_cast %213 : vector<8xf32> to vector<8x1xf32>
    %215 = tpu.reciprocal %214 {approx = true} : vector<8x1xf32> -> vector<8x1xf32>
    %216 = vector.broadcast %215 : vector<8x1xf32> to vector<8x8xf32>
    %217 = arith.mulf %212, %216 : vector<8x8xf32>
    %218 = arith.truncf %217 : vector<8x8xf32> to vector<8x8xbf16>
    %cst_88 = arith.constant dense<0.000000e+00> : vector<8x16xf32>
    %219 = tpu.matmul %218, %204, %cst_88 {dimension_numbers = #tpu.dot_dimension_numbers<[1], [0], [0], [1], [0, 0, 1, 1], [], []>} : vector<8x8xbf16>, vector<8x16xbf16>, vector<8x16xf32> -> vector<8x16xf32>
    %220 = tpu.concatenate %198, %219 in 1 : vector<8x16xf32>, vector<8x16xf32> -> vector<8x32xf32>
    %c1_89 = arith.constant 1 : index
    %c0_90 = arith.constant 0 : index
    %c0_91 = arith.constant 0 : index
    %221 = vector.load %arg7[%c1_89, %c0_90, %c0_91] : memref<2x32x32xbf16, #tpu.memory_space<vmem>>, vector<1x32x32xbf16>
    %222 = vector.shape_cast %221 : vector<1x32x32xbf16> to vector<32x32xbf16>
    %223 = arith.truncf %220 : vector<8x32xf32> to vector<8x32xbf16>
    %cst_92 = arith.constant dense<0.000000e+00> : vector<8x32xf32>
    %224 = tpu.matmul %223, %222, %cst_92 {dimension_numbers = #tpu.dot_dimension_numbers<[1], [0], [0], [1], [0, 0, 1, 1], [], []>} : vector<8x32xbf16>, vector<32x32xbf16>, vector<8x32xf32> -> vector<8x32xf32>
    %c1_93 = arith.constant 1 : index
    %c0_94 = arith.constant 0 : index
    %c0_95 = arith.constant 0 : index
    %225 = vector.load %arg8[%c1_93, %c0_94, %c0_95] : memref<2x1x32xf32, #tpu.memory_space<vmem>>, vector<1x1x32xf32>
    %226 = vector.shape_cast %225 : vector<1x1x32xf32> to vector<1x32xf32>
    %227 = vector.broadcast %226 : vector<1x32xf32> to vector<8x32xf32>
    %228 = arith.addf %224, %227 : vector<8x32xf32>
    %229 = arith.addf %228, %169 : vector<8x32xf32>
    %c1_96 = arith.constant 1 : index
    %c0_97 = arith.constant 0 : index
    %c0_98 = arith.constant 0 : index
    %230 = vector.load %arg9[%c1_96, %c0_97, %c0_98] : memref<2x1x32xf32, #tpu.memory_space<vmem>>, vector<1x1x32xf32>
    %231 = vector.shape_cast %230 : vector<1x1x32xf32> to vector<1x32xf32>
    %c1_99 = arith.constant 1 : index
    %c0_100 = arith.constant 0 : index
    %c0_101 = arith.constant 0 : index
    %232 = vector.load %arg10[%c1_99, %c0_100, %c0_101] : memref<2x1x32xf32, #tpu.memory_space<vmem>>, vector<1x1x32xf32>
    %233 = vector.shape_cast %232 : vector<1x1x32xf32> to vector<1x32xf32>
    %cst_102 = arith.constant dense<0.000000e+00> : vector<8xf32>
    %234 = vector.multi_reduction <add>, %229, %cst_102 [1] : vector<8x32xf32> to vector<8xf32>
    %235 = vector.shape_cast %234 : vector<8xf32> to vector<8x1xf32>
    %cst_103 = arith.constant 3.200000e+01 : f32
    %236 = vector.broadcast %cst_103 : f32 to vector<8x1xf32>
    %237 = arith.divf %235, %236 : vector<8x1xf32>
    %238 = vector.broadcast %237 : vector<8x1xf32> to vector<8x32xf32>
    %239 = arith.subf %229, %238 : vector<8x32xf32>
    %240 = arith.mulf %239, %239 : vector<8x32xf32>
    %cst_104 = arith.constant dense<0.000000e+00> : vector<8xf32>
    %241 = vector.multi_reduction <add>, %240, %cst_104 [1] : vector<8x32xf32> to vector<8xf32>
    %242 = vector.shape_cast %241 : vector<8xf32> to vector<8x1xf32>
    %cst_105 = arith.constant 3.200000e+01 : f32
    %243 = vector.broadcast %cst_105 : f32 to vector<8x1xf32>
    %244 = arith.divf %242, %243 : vector<8x1xf32>
    %cst_106 = arith.constant 9.99999996E-13 : f32
    %245 = vector.broadcast %cst_106 : f32 to vector<8x1xf32>
    %246 = arith.addf %244, %245 : vector<8x1xf32>
    %247 = math.rsqrt %246 : vector<8x1xf32>
    %248 = vector.broadcast %237 : vector<8x1xf32> to vector<8x32xf32>
    %249 = arith.subf %229, %248 : vector<8x32xf32>
    %250 = vector.broadcast %247 : vector<8x1xf32> to vector<8x32xf32>
    %251 = arith.mulf %249, %250 : vector<8x32xf32>
    %252 = vector.broadcast %231 : vector<1x32xf32> to vector<8x32xf32>
    %253 = arith.mulf %251, %252 : vector<8x32xf32>
    %254 = vector.broadcast %233 : vector<1x32xf32> to vector<8x32xf32>
    %255 = arith.addf %253, %254 : vector<8x32xf32>
    %c1_107 = arith.constant 1 : index
    %c0_108 = arith.constant 0 : index
    %c0_109 = arith.constant 0 : index
    %256 = vector.load %arg11[%c1_107, %c0_108, %c0_109] : memref<2x32x64xbf16, #tpu.memory_space<vmem>>, vector<1x32x64xbf16>
    %257 = vector.shape_cast %256 : vector<1x32x64xbf16> to vector<32x64xbf16>
    %258 = arith.truncf %255 : vector<8x32xf32> to vector<8x32xbf16>
    %cst_110 = arith.constant dense<0.000000e+00> : vector<8x64xf32>
    %259 = tpu.matmul %258, %257, %cst_110 {dimension_numbers = #tpu.dot_dimension_numbers<[1], [0], [0], [1], [0, 0, 1, 1], [], []>} : vector<8x32xbf16>, vector<32x64xbf16>, vector<8x64xf32> -> vector<8x64xf32>
    %c1_111 = arith.constant 1 : index
    %c0_112 = arith.constant 0 : index
    %c0_113 = arith.constant 0 : index
    %260 = vector.load %arg12[%c1_111, %c0_112, %c0_113] : memref<2x1x64xf32, #tpu.memory_space<vmem>>, vector<1x1x64xf32>
    %261 = vector.shape_cast %260 : vector<1x1x64xf32> to vector<1x64xf32>
    %262 = vector.broadcast %261 : vector<1x64xf32> to vector<8x64xf32>
    %263 = arith.addf %259, %262 : vector<8x64xf32>
    %cst_114 = arith.constant 5.000000e-01 : f32
    %264 = vector.broadcast %cst_114 : f32 to vector<8x64xf32>
    %265 = arith.mulf %264, %263 : vector<8x64xf32>
    %cst_115 = arith.constant 4.471500e-02 : f32
    %266 = vector.broadcast %cst_115 : f32 to vector<8x64xf32>
    %267 = arith.mulf %266, %263 : vector<8x64xf32>
    %268 = arith.mulf %267, %263 : vector<8x64xf32>
    %269 = arith.mulf %268, %263 : vector<8x64xf32>
    %270 = arith.addf %263, %269 : vector<8x64xf32>
    %cst_116 = arith.constant 0.797884583 : f32
    %271 = vector.broadcast %cst_116 : f32 to vector<8x64xf32>
    %272 = arith.mulf %271, %270 : vector<8x64xf32>
    %273 = math.tanh %272 : vector<8x64xf32>
    %cst_117 = arith.constant 1.000000e+00 : f32
    %274 = vector.broadcast %cst_117 : f32 to vector<8x64xf32>
    %275 = arith.addf %274, %273 : vector<8x64xf32>
    %276 = arith.mulf %265, %275 : vector<8x64xf32>
    %c1_118 = arith.constant 1 : index
    %c0_119 = arith.constant 0 : index
    %c0_120 = arith.constant 0 : index
    %277 = vector.load %arg13[%c1_118, %c0_119, %c0_120] : memref<2x64x32xbf16, #tpu.memory_space<vmem>>, vector<1x64x32xbf16>
    %278 = vector.shape_cast %277 : vector<1x64x32xbf16> to vector<64x32xbf16>
    %279 = arith.truncf %276 : vector<8x64xf32> to vector<8x64xbf16>
    %cst_121 = arith.constant dense<0.000000e+00> : vector<8x32xf32>
    %280 = tpu.matmul %279, %278, %cst_121 {dimension_numbers = #tpu.dot_dimension_numbers<[1], [0], [0], [1], [0, 0, 1, 1], [], []>} : vector<8x64xbf16>, vector<64x32xbf16>, vector<8x32xf32> -> vector<8x32xf32>
    %c1_122 = arith.constant 1 : index
    %c0_123 = arith.constant 0 : index
    %c0_124 = arith.constant 0 : index
    %281 = vector.load %arg14[%c1_122, %c0_123, %c0_124] : memref<2x1x32xf32, #tpu.memory_space<vmem>>, vector<1x1x32xf32>
    %282 = vector.shape_cast %281 : vector<1x1x32xf32> to vector<1x32xf32>
    %283 = vector.broadcast %282 : vector<1x32xf32> to vector<8x32xf32>
    %284 = arith.addf %280, %283 : vector<8x32xf32>
    %285 = arith.addf %284, %255 : vector<8x32xf32>
    %c1_125 = arith.constant 1 : index
    %c0_126 = arith.constant 0 : index
    %c0_127 = arith.constant 0 : index
    %286 = vector.load %arg15[%c1_125, %c0_126, %c0_127] : memref<2x1x32xf32, #tpu.memory_space<vmem>>, vector<1x1x32xf32>
    %287 = vector.shape_cast %286 : vector<1x1x32xf32> to vector<1x32xf32>
    %c1_128 = arith.constant 1 : index
    %c0_129 = arith.constant 0 : index
    %c0_130 = arith.constant 0 : index
    %288 = vector.load %arg16[%c1_128, %c0_129, %c0_130] : memref<2x1x32xf32, #tpu.memory_space<vmem>>, vector<1x1x32xf32>
    %289 = vector.shape_cast %288 : vector<1x1x32xf32> to vector<1x32xf32>
    %cst_131 = arith.constant dense<0.000000e+00> : vector<8xf32>
    %290 = vector.multi_reduction <add>, %285, %cst_131 [1] : vector<8x32xf32> to vector<8xf32>
    %291 = vector.shape_cast %290 : vector<8xf32> to vector<8x1xf32>
    %cst_132 = arith.constant 3.200000e+01 : f32
    %292 = vector.broadcast %cst_132 : f32 to vector<8x1xf32>
    %293 = arith.divf %291, %292 : vector<8x1xf32>
    %294 = vector.broadcast %293 : vector<8x1xf32> to vector<8x32xf32>
    %295 = arith.subf %285, %294 : vector<8x32xf32>
    %296 = arith.mulf %295, %295 : vector<8x32xf32>
    %cst_133 = arith.constant dense<0.000000e+00> : vector<8xf32>
    %297 = vector.multi_reduction <add>, %296, %cst_133 [1] : vector<8x32xf32> to vector<8xf32>
    %298 = vector.shape_cast %297 : vector<8xf32> to vector<8x1xf32>
    %cst_134 = arith.constant 3.200000e+01 : f32
    %299 = vector.broadcast %cst_134 : f32 to vector<8x1xf32>
    %300 = arith.divf %298, %299 : vector<8x1xf32>
    %cst_135 = arith.constant 9.99999996E-13 : f32
    %301 = vector.broadcast %cst_135 : f32 to vector<8x1xf32>
    %302 = arith.addf %300, %301 : vector<8x1xf32>
    %303 = math.rsqrt %302 : vector<8x1xf32>
    %304 = vector.broadcast %293 : vector<8x1xf32> to vector<8x32xf32>
    %305 = arith.subf %285, %304 : vector<8x32xf32>
    %306 = vector.broadcast %303 : vector<8x1xf32> to vector<8x32xf32>
    %307 = arith.mulf %305, %306 : vector<8x32xf32>
    %308 = vector.broadcast %287 : vector<1x32xf32> to vector<8x32xf32>
    %309 = arith.mulf %307, %308 : vector<8x32xf32>
    %310 = vector.broadcast %289 : vector<1x32xf32> to vector<8x32xf32>
    %311 = arith.addf %309, %310 : vector<8x32xf32>
    %312 = vector.extract_strided_slice %311 {offsets = [0, 0], sizes = [1, 32], strides = [1, 1]} : vector<8x32xf32> to vector<1x32xf32>
    %c0_136 = arith.constant 0 : index
    %c0_137 = arith.constant 0 : index
    %313 = vector.load %arg17[%c0_136, %c0_137] : memref<32x32xbf16, #tpu.memory_space<vmem>>, vector<32x32xbf16>
    %314 = arith.truncf %312 : vector<1x32xf32> to vector<1x32xbf16>
    %cst_138 = arith.constant dense<0.000000e+00> : vector<1x32xf32>
    %315 = tpu.matmul %314, %313, %cst_138 {dimension_numbers = #tpu.dot_dimension_numbers<[1], [0], [0], [1], [0, 0, 1, 1], [], []>} : vector<1x32xbf16>, vector<32x32xbf16>, vector<1x32xf32> -> vector<1x32xf32>
    %c0_139 = arith.constant 0 : index
    %c0_140 = arith.constant 0 : index
    %316 = vector.load %arg18[%c0_139, %c0_140] : memref<1x32xf32, #tpu.memory_space<vmem>>, vector<1x32xf32>
    %317 = arith.addf %315, %316 : vector<1x32xf32>
    %318 = math.tanh %317 : vector<1x32xf32>
    %319 = vector.shape_cast %318 : vector<1x32xf32> to vector<1x1x32xf32>
    %c0_141 = arith.constant 0 : index
    %c0_142 = arith.constant 0 : index
    %c0_143 = arith.constant 0 : index
    %320 = vector.load %arg19[%c0_141, %c0_142, %c0_143] : memref<1x1x32xf32, #tpu.memory_space<vmem>>, vector<1x1x32xf32>
    tpu.vector_store %arg19[%c0_141, %c0_142, %c0_143], %319 {strides = array<i32>} : memref<1x1x32xf32, #tpu.memory_space<vmem>>, vector<1x1x32xf32>,
    return
  }
  func.func @transform_0(%arg0: i32) -> (i32, i32, i32) {
    %c0_i32 = arith.constant 0 : i32
    %c0_i32_0 = arith.constant 0 : i32
    %c0_i32_1 = arith.constant 0 : i32
    return %arg0, %c0_i32, %c0_i32_0 : i32, i32, i32
  }
  func.func @transform_1(%arg0: i32) -> (i32, i32, i32) {
    %c0_i32 = arith.constant 0 : i32
    %c0_i32_0 = arith.constant 0 : i32
    %c0_i32_1 = arith.constant 0 : i32
    return %arg0, %c0_i32, %c0_i32_0 : i32, i32, i32
  }
  func.func @transform_2(%arg0: i32) -> (i32, i32) {
    %c0_i32 = arith.constant 0 : i32
    %c0_i32_0 = arith.constant 0 : i32
    %c0_i32_1 = arith.constant 0 : i32
    return %c0_i32, %c0_i32_0 : i32, i32
  }
  func.func @transform_3(%arg0: i32) -> (i32, i32) {
    %c0_i32 = arith.constant 0 : i32
    %c0_i32_0 = arith.constant 0 : i32
    %c0_i32_1 = arith.constant 0 : i32
    return %c0_i32, %c0_i32_0 : i32, i32
  }
  func.func @transform_4(%arg0: i32) -> (i32, i32, i32) {
    %c0_i32 = arith.constant 0 : i32
    %c0_i32_0 = arith.constant 0 : i32
    %c0_i32_1 = arith.constant 0 : i32
    %c0_i32_2 = arith.constant 0 : i32
    return %c0_i32, %c0_i32_0, %c0_i32_1 : i32, i32, i32
  }
  func.func @transform_5(%arg0: i32) -> (i32, i32, i32) {
    %c0_i32 = arith.constant 0 : i32
    %c0_i32_0 = arith.constant 0 : i32
    %c0_i32_1 = arith.constant 0 : i32
    %c0_i32_2 = arith.constant 0 : i32
    return %c0_i32, %c0_i32_0, %c0_i32_1 : i32, i32, i32
  }
  func.func @transform_6(%arg0: i32) -> (i32, i32, i32) {
    %c0_i32 = arith.constant 0 : i32
    %c0_i32_0 = arith.constant 0 : i32
    %c0_i32_1 = arith.constant 0 : i32
    %c0_i32_2 = arith.constant 0 : i32
    return %c0_i32, %c0_i32_0, %c0_i32_1 : i32, i32, i32
  }
  func.func @transform_7(%arg0: i32) -> (i32, i32, i32) {
    %c0_i32 = arith.constant 0 : i32
    %c0_i32_0 = arith.constant 0 : i32
    %c0_i32_1 = arith.constant 0 : i32
    %c0_i32_2 = arith.constant 0 : i32
    return %c0_i32, %c0_i32_0, %c0_i32_1 : i32, i32, i32
  }
  func.func @transform_8(%arg0: i32) -> (i32, i32, i32) {
    %c0_i32 = arith.constant 0 : i32
    %c0_i32_0 = arith.constant 0 : i32
    %c0_i32_1 = arith.constant 0 : i32
    %c0_i32_2 = arith.constant 0 : i32
    return %c0_i32, %c0_i32_0, %c0_i32_1 : i32, i32, i32
  }
  func.func @transform_9(%arg0: i32) -> (i32, i32, i32) {
    %c0_i32 = arith.constant 0 : i32
    %c0_i32_0 = arith.constant 0 : i32
    %c0_i32_1 = arith.constant 0 : i32
    %c0_i32_2 = arith.constant 0 : i32
    return %c0_i32, %c0_i32_0, %c0_i32_1 : i32, i32, i32
  }
  func.func @transform_10(%arg0: i32) -> (i32, i32, i32) {
    %c0_i32 = arith.constant 0 : i32
    %c0_i32_0 = arith.constant 0 : i32
    %c0_i32_1 = arith.constant 0 : i32
    %c0_i32_2 = arith.constant 0 : i32
    return %c0_i32, %c0_i32_0, %c0_i32_1 : i32, i32, i32
  }
  func.func @transform_11(%arg0: i32) -> (i32, i32, i32) {
    %c0_i32 = arith.constant 0 : i32
    %c0_i32_0 = arith.constant 0 : i32
    %c0_i32_1 = arith.constant 0 : i32
    %c0_i32_2 = arith.constant 0 : i32
    return %c0_i32, %c0_i32_0, %c0_i32_1 : i32, i32, i32
  }
  func.func @transform_12(%arg0: i32) -> (i32, i32, i32) {
    %c0_i32 = arith.constant 0 : i32
    %c0_i32_0 = arith.constant 0 : i32
    %c0_i32_1 = arith.constant 0 : i32
    %c0_i32_2 = arith.constant 0 : i32
    return %c0_i32, %c0_i32_0, %c0_i32_1 : i32, i32, i32
  }
  func.func @transform_13(%arg0: i32) -> (i32, i32, i32) {
    %c0_i32 = arith.constant 0 : i32
    %c0_i32_0 = arith.constant 0 : i32
    %c0_i32_1 = arith.constant 0 : i32
    %c0_i32_2 = arith.constant 0 : i32
    return %c0_i32, %c0_i32_0, %c0_i32_1 : i32, i32, i32
  }
  func.func @transform_14(%arg0: i32) -> (i32, i32, i32) {
    %c0_i32 = arith.constant 0 : i32
    %c0_i32_0 = arith.constant 0 : i32
    %c0_i32_1 = arith.constant 0 : i32
    %c0_i32_2 = arith.constant 0 : i32
    return %c0_i32, %c0_i32_0, %c0_i32_1 : i32, i32, i32
  }
  func.func @transform_15(%arg0: i32) -> (i32, i32, i32) {
    %c0_i32 = arith.constant 0 : i32
    %c0_i32_0 = arith.constant 0 : i32
    %c0_i32_1 = arith.constant 0 : i32
    %c0_i32_2 = arith.constant 0 : i32
    return %c0_i32, %c0_i32_0, %c0_i32_1 : i32, i32, i32
  }
  func.func @transform_16(%arg0: i32) -> (i32, i32) {
    %c0_i32 = arith.constant 0 : i32
    %c0_i32_0 = arith.constant 0 : i32
    %c0_i32_1 = arith.constant 0 : i32
    return %c0_i32, %c0_i32_0 : i32, i32
  }
  func.func @transform_17(%arg0: i32) -> (i32, i32) {
    %c0_i32 = arith.constant 0 : i32
    %c0_i32_0 = arith.constant 0 : i32
    %c0_i32_1 = arith.constant 0 : i32
    return %c0_i32, %c0_i32_0 : i32, i32
  }
  func.func @transform_18(%arg0: i32) -> (i32, i32, i32) {
    %c0_i32 = arith.constant 0 : i32
    %c0_i32_0 = arith.constant 0 : i32
    %c0_i32_1 = arith.constant 0 : i32
    return %arg0, %c0_i32, %c0_i32_0 : i32, i32, i32
  }
}

</mosaic_0001>

<llo_original>
// kernel: bert_encoder_forward.1
$region0: #{bert_encoder_forward.1}
  #allocation0 [shape = 'u32[]', space=smem, size = 0x4, offset = 0x4, fixed_abs, tag = 'smem constant byte address 0x4 - core index']
  #allocation1 [shape = 'u32[72,128]{1,0:T(1,128)}', space=vmem, size = 0x9000, scoped, tag = 'internal scratch']
  %s0 = inlined_call_operand.vmem [shape: f32[2,8,32], index: 0, kind: input, shape index: {}]
  %s1 = inlined_call_operand.vmem [shape: f32[2,1,8], index: 1, kind: input, shape index: {}]
  %s2 = inlined_call_operand.vmem [shape: f32[1,32], index: 2, kind: input, shape index: {}]
  %s3 = inlined_call_operand.vmem [shape: f32[1,32], index: 3, kind: input, shape index: {}]
  %s4 = inlined_call_operand.vmem [shape: bf16[2,32,96], index: 4, kind: input, shape index: {}]
  %s5 = inlined_call_operand.vmem [shape: f32[2,1,96], index: 5, kind: input, shape index: {}]
  %s6 = inlined_call_operand.vmem [shape: bf16[2,32,32], index: 6, kind: input, shape index: {}]
  %s7 = inlined_call_operand.vmem [shape: f32[2,1,32], index: 7, kind: input, shape index: {}]
  %s8 = inlined_call_operand.vmem [shape: f32[2,1,32], index: 8, kind: input, shape index: {}]
  %s9 = inlined_call_operand.vmem [shape: f32[2,1,32], index: 9, kind: input, shape index: {}]
  %s10 = inlined_call_operand.vmem [shape: bf16[2,32,64], index: 10, kind: input, shape index: {}]
  %s11 = inlined_call_operand.vmem [shape: f32[2,1,64], index: 11, kind: input, shape index: {}]
  %s12 = inlined_call_operand.vmem [shape: bf16[2,64,32], index: 12, kind: input, shape index: {}]
  %s13 = inlined_call_operand.vmem [shape: f32[2,1,32], index: 13, kind: input, shape index: {}]
  %s14 = inlined_call_operand.vmem [shape: f32[2,1,32], index: 14, kind: input, shape index: {}]
  %s15 = inlined_call_operand.vmem [shape: f32[2,1,32], index: 15, kind: input, shape index: {}]
  %s16 = inlined_call_operand.vmem [shape: bf16[32,32], index: 16, kind: input, shape index: {}]
  %s17 = inlined_call_operand.vmem [shape: f32[1,32], index: 17, kind: input, shape index: {}]
  %s18 = inlined_call_operand.hbm [shape: f32[2,1,32], index: 18, kind: output, shape index: {}]
  %s19 = sld [smem:[#allocation0]]
  $region105: #{bert_encoder_forward.1} parent=0
    _
  %s21 = ssub.s32 1, %s19
  %s22 = scalar_select 0, %s21, %s19
  $region1: #{bert_encoder_forward.1} parent=0
    #allocation2 [shape = 'u8[1024]{0}', space=vmem, size = 0x400, scoped, tag = 'output window, operand 0']
    #allocation3 [shape = 's32[2]{0}', space=sflag, size = 0x8, scoped, tag = 'scoped memory for bert_encoder_forward.1']
    %23 = vsyncpa [#allocation3], 0
    %s24 = scalar_lea.sflag [#allocation3], 1
    %25 = vsyncpa %s24, 0
    loop: start=0, step=1, limit=4
    $region2: #{bert_encoder_forward.1} parent=1 // loop_pre_header
      _
    $region3: #{bert_encoder_forward.1} parent=1 // loop_header
      %s27 = sphi 0, %s31
      %p28 = scmp.ge.s32.totalorder %s27, 4
      %s37 = sphi 0, %s39
      %s40 = sphi 0, %s37
      %s41 = sphi 0, %s40
      %s57 = sphi 0, %s41
      %s63 = sphi 0, %s65
      %s66 = sphi 0, %s63
      %s67 = sphi 0, %s66
      %s83 = sphi 0, %s67
      %s87 = sphi 0, %s87
      %s89 = sphi 0, %s87
      %s90 = sphi 0, %s89
      %s104 = sphi 0, %s90
      %s108 = sphi 0, %s108
      %s110 = sphi 0, %s108
      %s111 = sphi 0, %s110
      %s125 = sphi 0, %s111
      %s129 = sphi 0, %s129
      %s131 = sphi 0, %s129
      %s132 = sphi 0, %s131
      %s146 = sphi 0, %s132
      %s150 = sphi 0, %s150
      %s152 = sphi 0, %s150
      %s153 = sphi 0, %s152
      %s167 = sphi 0, %s153
      %s171 = sphi 0, %s171
      %s173 = sphi 0, %s171
      %s174 = sphi 0, %s173
      %s188 = sphi 0, %s174
      %s192 = sphi 0, %s192
      %s194 = sphi 0, %s192
      %s195 = sphi 0, %s194
      %s209 = sphi 0, %s195
      %s213 = sphi 0, %s213
      %s215 = sphi 0, %s213
      %s216 = sphi 0, %s215
      %s230 = sphi 0, %s216
      %s234 = sphi 0, %s234
      %s236 = sphi 0, %s234
      %s237 = sphi 0, %s236
      %s251 = sphi 0, %s237
      %s255 = sphi 0, %s255
      %s257 = sphi 0, %s255
      %s258 = sphi 0, %s257
      %s272 = sphi 0, %s258
      %s276 = sphi 0, %s276
      %s278 = sphi 0, %s276
      %s279 = sphi 0, %s278
      %s293 = sphi 0, %s279
      %s297 = sphi 0, %s297
      %s299 = sphi 0, %s297
      %s300 = sphi 0, %s299
      %s314 = sphi 0, %s300
      %s318 = sphi 0, %s318
      %s320 = sphi 0, %s318
      %s321 = sphi 0, %s320
      %s335 = sphi 0, %s321
      %s339 = sphi 0, %s339
      %s341 = sphi 0, %s339
      %s342 = sphi 0, %s341
      %s356 = sphi 0, %s342
      %s360 = sphi 0, %s360
      %s362 = sphi 0, %s360
      %s363 = sphi 0, %s362
      %s377 = sphi 0, %s363
      %s381 = sphi 0, %s381
      %s383 = sphi 0, %s381
      %s384 = sphi 0, %s383
      %s398 = sphi 0, %s384
      %s402 = sphi 0, %s402
      %s404 = sphi 0, %s402
      %s405 = sphi 0, %s404
      %s419 = sphi 0, %s405
      %s425 = sphi 0, %s427
      %s428 = sphi 0, %s425
      %s429 = sphi 0, %s428
      %s445 = sphi 0, %s429
    $region4: #{bert_encoder_forward.1} parent=1 // loop_header_branch
      %30 = sbr.rel (%p28) target = $region8
    $region5: #{bert_encoder_forward.1} parent=1 // loop_body
      %s32 = ssub.s32 %s27, 1
      %s33 = ssub.s32 %s27, 2
      %s34 = sadd.s32 %s27, 1
      %s35 = ssub.s32 %s27, %s34
      %p36 = scmp.eq.s32.totalorder %s35, 0
      %s38 = sadd.s32 %s37, 1
      %s39 = scalar_select %p36, %s37, %s38
      %p42 = pneg %p36
      %p43 = scmp.eq.s32.totalorder %s27, 1
      %p44 = por %p42, %p43
      %p45 = scmp.ne.s32.totalorder %s37, %s40
      %p46 = scmp.eq.s32.totalorder %s27, 0
      %p47 = por %p45, %p46
      %p48 = scmp.ne.s32.totalorder %s37, %s40
      %p49 = scmp.eq.s32.totalorder %s32, 1
      %p50 = por %p48, %p49
      %p51 = scmp.ne.s32.totalorder %s40, %s41
      %p52 = scmp.eq.s32.totalorder %s32, 0
      %p53 = por %p51, %p52
      %p54 = scmp.ne.s32.totalorder %s40, %s41
      %p55 = scmp.eq.s32.totalorder %s33, 1
      %p56 = por %p54, %p55
      %p58 = scmp.ne.s32.totalorder %s41, %s57
      %p59 = scmp.eq.s32.totalorder %s33, 0
      %p60 = por %p58, %p59
      %s61 = ssub.s32 %s27, %s34
      %p62 = scmp.eq.s32.totalorder %s61, 0
      %s64 = sadd.s32 %s63, 1
      %s65 = scalar_select %p62, %s63, %s64
      %p68 = pneg %p62
      %p69 = scmp.eq.s32.totalorder %s27, 1
      %p70 = por %p68, %p69
      %p71 = scmp.ne.s32.totalorder %s63, %s66
      %p72 = scmp.eq.s32.totalorder %s27, 0
      %p73 = por %p71, %p72
      %p74 = scmp.ne.s32.totalorder %s63, %s66
      %p75 = scmp.eq.s32.totalorder %s32, 1
      %p76 = por %p74, %p75
      %p77 = scmp.ne.s32.totalorder %s66, %s67
      %p78 = scmp.eq.s32.totalorder %s32, 0
      %p79 = por %p77, %p78
      %p80 = scmp.ne.s32.totalorder %s66, %s67
      %p81 = scmp.eq.s32.totalorder %s33, 1
      %p82 = por %p80, %p81
      %p84 = scmp.ne.s32.totalorder %s67, %s83
      %p85 = scmp.eq.s32.totalorder %s33, 0
      %p86 = por %p84, %p85
      %s88 = sadd.s32 %s87, 1
      %p91 = scmp.eq.s32.totalorder %s27, 1
      %p92 = scmp.ne.s32.totalorder %s87, %s89
      %p93 = scmp.eq.s32.totalorder %s27, 0
      %p94 = por %p92, %p93
      %p95 = scmp.ne.s32.totalorder %s87, %s89
      %p96 = scmp.eq.s32.totalorder %s32, 1
      %p97 = por %p95, %p96
      %p98 = scmp.ne.s32.totalorder %s89, %s90
      %p99 = scmp.eq.s32.totalorder %s32, 0
      %p100 = por %p98, %p99
      %p101 = scmp.ne.s32.totalorder %s89, %s90
      %p102 = scmp.eq.s32.totalorder %s33, 1
      %p103 = por %p101, %p102
      %p105 = scmp.ne.s32.totalorder %s90, %s104
      %p106 = scmp.eq.s32.totalorder %s33, 0
      %p107 = por %p105, %p106
      %s109 = sadd.s32 %s108, 1
      %p112 = scmp.eq.s32.totalorder %s27, 1
      %p113 = scmp.ne.s32.totalorder %s108, %s110
      %p114 = scmp.eq.s32.totalorder %s27, 0
      %p115 = por %p113, %p114
      %p116 = scmp.ne.s32.totalorder %s108, %s110
      %p117 = scmp.eq.s32.totalorder %s32, 1
      %p118 = por %p116, %p117
      %p119 = scmp.ne.s32.totalorder %s110, %s111
      %p120 = scmp.eq.s32.totalorder %s32, 0
      %p121 = por %p119, %p120
      %p122 = scmp.ne.s32.totalorder %s110, %s111
      %p123 = scmp.eq.s32.totalorder %s33, 1
      %p124 = por %p122, %p123
      %p126 = scmp.ne.s32.totalorder %s111, %s125
      %p127 = scmp.eq.s32.totalorder %s33, 0
      %p128 = por %p126, %p127
      %s130 = sadd.s32 %s129, 1
      %p133 = scmp.eq.s32.totalorder %s27, 1
      %p134 = scmp.ne.s32.totalorder %s129, %s131
      %p135 = scmp.eq.s32.totalorder %s27, 0
      %p136 = por %p134, %p135
      %p137 = scmp.ne.s32.totalorder %s129, %s131
      %p138 = scmp.eq.s32.totalorder %s32, 1
      %p139 = por %p137, %p138
      %p140 = scmp.ne.s32.totalorder %s131, %s132
      %p141 = scmp.eq.s32.totalorder %s32, 0
      %p142 = por %p140, %p141
      %p143 = scmp.ne.s32.totalorder %s131, %s132
      %p144 = scmp.eq.s32.totalorder %s33, 1
      %p145 = por %p143, %p144
      %p147 = scmp.ne.s32.totalorder %s132, %s146
      %p148 = scmp.eq.s32.totalorder %s33, 0
      %p149 = por %p147, %p148
      %s151 = sadd.s32 %s150, 1
      %p154 = scmp.eq.s32.totalorder %s27, 1
      %p155 = scmp.ne.s32.totalorder %s150, %s152
      %p156 = scmp.eq.s32.totalorder %s27, 0
      %p157 = por %p155, %p156
      %p158 = scmp.ne.s32.totalorder %s150, %s152
      %p159 = scmp.eq.s32.totalorder %s32, 1
      %p160 = por %p158, %p159
      %p161 = scmp.ne.s32.totalorder %s152, %s153
      %p162 = scmp.eq.s32.totalorder %s32, 0
      %p163 = por %p161, %p162
      %p164 = scmp.ne.s32.totalorder %s152, %s153
      %p165 = scmp.eq.s32.totalorder %s33, 1
      %p166 = por %p164, %p165
      %p168 = scmp.ne.s32.totalorder %s153, %s167
      %p169 = scmp.eq.s32.totalorder %s33, 0
      %p170 = por %p168, %p169
      %s172 = sadd.s32 %s171, 1
      %p175 = scmp.eq.s32.totalorder %s27, 1
      %p176 = scmp.ne.s32.totalorder %s171, %s173
      %p177 = scmp.eq.s32.totalorder %s27, 0
      %p178 = por %p176, %p177
      %p179 = scmp.ne.s32.totalorder %s171, %s173
      %p180 = scmp.eq.s32.totalorder %s32, 1
      %p181 = por %p179, %p180
      %p182 = scmp.ne.s32.totalorder %s173, %s174
      %p183 = scmp.eq.s32.totalorder %s32, 0
      %p184 = por %p182, %p183
      %p185 = scmp.ne.s32.totalorder %s173, %s174
      %p186 = scmp.eq.s32.totalorder %s33, 1
      %p187 = por %p185, %p186
      %p189 = scmp.ne.s32.totalorder %s174, %s188
      %p190 = scmp.eq.s32.totalorder %s33, 0
      %p191 = por %p189, %p190
      %s193 = sadd.s32 %s192, 1
      %p196 = scmp.eq.s32.totalorder %s27, 1
      %p197 = scmp.ne.s32.totalorder %s192, %s194
      %p198 = scmp.eq.s32.totalorder %s27, 0
      %p199 = por %p197, %p198
      %p200 = scmp.ne.s32.totalorder %s192, %s194
      %p201 = scmp.eq.s32.totalorder %s32, 1
      %p202 = por %p200, %p201
      %p203 = scmp.ne.s32.totalorder %s194, %s195
      %p204 = scmp.eq.s32.totalorder %s32, 0
      %p205 = por %p203, %p204
      %p206 = scmp.ne.s32.totalorder %s194, %s195
      %p207 = scmp.eq.s32.totalorder %s33, 1
      %p208 = por %p206, %p207
      %p210 = scmp.ne.s32.totalorder %s195, %s209
      %p211 = scmp.eq.s32.totalorder %s33, 0
      %p212 = por %p210, %p211
      %s214 = sadd.s32 %s213, 1
      %p217 = scmp.eq.s32.totalorder %s27, 1
      %p218 = scmp.ne.s32.totalorder %s213, %s215
      %p219 = scmp.eq.s32.totalorder %s27, 0
      %p220 = por %p218, %p219
      %p221 = scmp.ne.s32.totalorder %s213, %s215
      %p222 = scmp.eq.s32.totalorder %s32, 1
      %p223 = por %p221, %p222
      %p224 = scmp.ne.s32.totalorder %s215, %s216
      %p225 = scmp.eq.s32.totalorder %s32, 0
      %p226 = por %p224, %p225
      %p227 = scmp.ne.s32.totalorder %s215, %s216
      %p228 = scmp.eq.s32.totalorder %s33, 1
      %p229 = por %p227, %p228
      %p231 = scmp.ne.s32.totalorder %s216, %s230
      %p232 = scmp.eq.s32.totalorder %s33, 0
      %p233 = por %p231, %p232
      %s235 = sadd.s32 %s234, 1
      %p238 = scmp.eq.s32.totalorder %s27, 1
      %p239 = scmp.ne.s32.totalorder %s234, %s236
      %p240 = scmp.eq.s32.totalorder %s27, 0
      %p241 = por %p239, %p240
      %p242 = scmp.ne.s32.totalorder %s234, %s236
      %p243 = scmp.eq.s32.totalorder %s32, 1
      %p244 = por %p242, %p243
      %p245 = scmp.ne.s32.totalorder %s236, %s237
      %p246 = scmp.eq.s32.totalorder %s32, 0
      %p247 = por %p245, %p246
      %p248 = scmp.ne.s32.totalorder %s236, %s237
      %p249 = scmp.eq.s32.totalorder %s33, 1
      %p250 = por %p248, %p249
      %p252 = scmp.ne.s32.totalorder %s237, %s251
      %p253 = scmp.eq.s32.totalorder %s33, 0
      %p254 = por %p252, %p253
      %s256 = sadd.s32 %s255, 1
      %p259 = scmp.eq.s32.totalorder %s27, 1
      %p260 = scmp.ne.s32.totalorder %s255, %s257
      %p261 = scmp.eq.s32.totalorder %s27, 0
      %p262 = por %p260, %p261
      %p263 = scmp.ne.s32.totalorder %s255, %s257
      %p264 = scmp.eq.s32.totalorder %s32, 1
      %p265 = por %p263, %p264
      %p266 = scmp.ne.s32.totalorder %s257, %s258
      %p267 = scmp.eq.s32.totalorder %s32, 0
      %p268 = por %p266, %p267
      %p269 = scmp.ne.s32.totalorder %s257, %s258
      %p270 = scmp.eq.s32.totalorder %s33, 1
      %p271 = por %p269, %p270
      %p273 = scmp.ne.s32.totalorder %s258, %s272
      %p274 = scmp.eq.s32.totalorder %s33, 0
      %p275 = por %p273, %p274
      %s277 = sadd.s32 %s276, 1
      %p280 = scmp.eq.s32.totalorder %s27, 1
      %p281 = scmp.ne.s32.totalorder %s276, %s278
      %p282 = scmp.eq.s32.totalorder %s27, 0
      %p283 = por %p281, %p282
      %p284 = scmp.ne.s32.totalorder %s276, %s278
      %p285 = scmp.eq.s32.totalorder %s32, 1
      %p286 = por %p284, %p285
      %p287 = scmp.ne.s32.totalorder %s278, %s279
      %p288 = scmp.eq.s32.totalorder %s32, 0
      %p289 = por %p287, %p288
      %p290 = scmp.ne.s32.totalorder %s278, %s279
      %p291 = scmp.eq.s32.totalorder %s33, 1
      %p292 = por %p290, %p291
      %p294 = scmp.ne.s32.totalorder %s279, %s293
      %p295 = scmp.eq.s32.totalorder %s33, 0
      %p296 = por %p294, %p295
      %s298 = sadd.s32 %s297, 1
      %p301 = scmp.eq.s32.totalorder %s27, 1
      %p302 = scmp.ne.s32.totalorder %s297, %s299
      %p303 = scmp.eq.s32.totalorder %s27, 0
      %p304 = por %p302, %p303
      %p305 = scmp.ne.s32.totalorder %s297, %s299
      %p306 = scmp.eq.s32.totalorder %s32, 1
      %p307 = por %p305, %p306
      %p308 = scmp.ne.s32.totalorder %s299, %s300
      %p309 = scmp.eq.s32.totalorder %s32, 0
      %p310 = por %p308, %p309
      %p311 = scmp.ne.s32.totalorder %s299, %s300
      %p312 = scmp.eq.s32.totalorder %s33, 1
      %p313 = por %p311, %p312
      %p315 = scmp.ne.s32.totalorder %s300, %s314
      %p316 = scmp.eq.s32.totalorder %s33, 0
      %p317 = por %p315, %p316
      %s319 = sadd.s32 %s318, 1
      %p322 = scmp.eq.s32.totalorder %s27, 1
      %p323 = scmp.ne.s32.totalorder %s318, %s320
      %p324 = scmp.eq.s32.totalorder %s27, 0
      %p325 = por %p323, %p324
      %p326 = scmp.ne.s32.totalorder %s318, %s320
      %p327 = scmp.eq.s32.totalorder %s32, 1
      %p328 = por %p326, %p327
      %p329 = scmp.ne.s32.totalorder %s320, %s321
      %p330 = scmp.eq.s32.totalorder %s32, 0
      %p331 = por %p329, %p330
      %p332 = scmp.ne.s32.totalorder %s320, %s321
      %p333 = scmp.eq.s32.totalorder %s33, 1
      %p334 = por %p332, %p333
      %p336 = scmp.ne.s32.totalorder %s321, %s335
      %p337 = scmp.eq.s32.totalorder %s33, 0
      %p338 = por %p336, %p337
      %s340 = sadd.s32 %s339, 1
      %p343 = scmp.eq.s32.totalorder %s27, 1
      %p344 = scmp.ne.s32.totalorder %s339, %s341
      %p345 = scmp.eq.s32.totalorder %s27, 0
      %p346 = por %p344, %p345
      %p347 = scmp.ne.s32.totalorder %s339, %s341
      %p348 = scmp.eq.s32.totalorder %s32, 1
      %p349 = por %p347, %p348
      %p350 = scmp.ne.s32.totalorder %s341, %s342
      %p351 = scmp.eq.s32.totalorder %s32, 0
      %p352 = por %p350, %p351
      %p353 = scmp.ne.s32.totalorder %s341, %s342
      %p354 = scmp.eq.s32.totalorder %s33, 1
      %p355 = por %p353, %p354
      %p357 = scmp.ne.s32.totalorder %s342, %s356
      %p358 = scmp.eq.s32.totalorder %s33, 0
      %p359 = por %p357, %p358
      %s361 = sadd.s32 %s360, 1
      %p364 = scmp.eq.s32.totalorder %s27, 1
      %p365 = scmp.ne.s32.totalorder %s360, %s362
      %p366 = scmp.eq.s32.totalorder %s27, 0
      %p367 = por %p365, %p366
      %p368 = scmp.ne.s32.totalorder %s360, %s362
      %p369 = scmp.eq.s32.totalorder %s32, 1
      %p370 = por %p368, %p369
      %p371 = scmp.ne.s32.totalorder %s362, %s363
      %p372 = scmp.eq.s32.totalorder %s32, 0
      %p373 = por %p371, %p372
      %p374 = scmp.ne.s32.totalorder %s362, %s363
      %p375 = scmp.eq.s32.totalorder %s33, 1
      %p376 = por %p374, %p375
      %p378 = scmp.ne.s32.totalorder %s363, %s377
      %p379 = scmp.eq.s32.totalorder %s33, 0
      %p380 = por %p378, %p379
      %s382 = sadd.s32 %s381, 1
      %p385 = scmp.eq.s32.totalorder %s27, 1
      %p386 = scmp.ne.s32.totalorder %s381, %s383
      %p387 = scmp.eq.s32.totalorder %s27, 0
      %p388 = por %p386, %p387
      %p389 = scmp.ne.s32.totalorder %s381, %s383
      %p390 = scmp.eq.s32.totalorder %s32, 1
      %p391 = por %p389, %p390
      %p392 = scmp.ne.s32.totalorder %s383, %s384
      %p393 = scmp.eq.s32.totalorder %s32, 0
      %p394 = por %p392, %p393
      %p395 = scmp.ne.s32.totalorder %s383, %s384
      %p396 = scmp.eq.s32.totalorder %s33, 1
      %p397 = por %p395, %p396
      %p399 = scmp.ne.s32.totalorder %s384, %s398
      %p400 = scmp.eq.s32.totalorder %s33, 0
      %p401 = por %p399, %p400
      %s403 = sadd.s32 %s402, 1
      %p406 = scmp.eq.s32.totalorder %s27, 1
      %p407 = scmp.ne.s32.totalorder %s402, %s404
      %p408 = scmp.eq.s32.totalorder %s27, 0
      %p409 = por %p407, %p408
      %p410 = scmp.ne.s32.totalorder %s402, %s404
      %p411 = scmp.eq.s32.totalorder %s32, 1
      %p412 = por %p410, %p411
      %p413 = scmp.ne.s32.totalorder %s404, %s405
      %p414 = scmp.eq.s32.totalorder %s32, 0
      %p415 = por %p413, %p414
      %p416 = scmp.ne.s32.totalorder %s404, %s405
      %p417 = scmp.eq.s32.totalorder %s33, 1
      %p418 = por %p416, %p417
      %p420 = scmp.ne.s32.totalorder %s405, %s419
      %p421 = scmp.eq.s32.totalorder %s33, 0
      %p422 = por %p420, %p421
      %s423 = ssub.s32 %s27, %s34
      %p424 = scmp.eq.s32.totalorder %s423, 0
      %s426 = sadd.s32 %s425, 1
      %s427 = scalar_select %p424, %s425, %s426
      %p430 = pneg %p424
      %p431 = scmp.eq.s32.totalorder %s27, 1
      %p432 = por %p430, %p431
      %p433 = scmp.ne.s32.totalorder %s425, %s428
      %p434 = scmp.eq.s32.totalorder %s27, 0
      %p435 = por %p433, %p434
      %p436 = scmp.ne.s32.totalorder %s425, %s428
      %p437 = scmp.eq.s32.totalorder %s32, 1
      %p438 = por %p436, %p437
      %p439 = scmp.ne.s32.totalorder %s428, %s429
      %p440 = scmp.eq.s32.totalorder %s32, 0
      %p441 = por %p439, %p440
      %p442 = scmp.ne.s32.totalorder %s428, %s429
      %p443 = scmp.eq.s32.totalorder %s33, 1
      %p444 = por %p442, %p443
      %p446 = scmp.ne.s32.totalorder %s429, %s445
      %p447 = scmp.eq.s32.totalorder %s33, 0
      %p448 = por %p446, %p447
      %p449 = scmp.le.s32.totalorder 1, %s27
      %p450 = scmp.lt.s32.totalorder %s27, 3
      %p451 = pnand %p449, %p450
      %p452 = pneg %p451
      // Predicated region
      $region9: #{bert_encoder_forward.1} parent=5 // pred_check
        _
      $region10: #{bert_encoder_forward.1} parent=5 // pred_check_branch
        %454 = sbr.rel (%p451) target = $region12
      $region11: #{bert_encoder_forward.1} parent=5 // pred_region
        %s455 = ssub.s32 %s27, 1
        // Predicated region
        $region13: #{bert_encoder_forward.1} parent=11 // pred_check
          %p456 = pneg %p100
        $region14: #{bert_encoder_forward.1} parent=11 // pred_check_branch
          %458 = sbr.rel (%p456) target = $region16
        $region15: #{bert_encoder_forward.1} parent=11 // pred_region
          _
        $region16: #{bert_encoder_forward.1} parent=11 // pred_fallthru
          _
        // Predicated region
        $region17: #{bert_encoder_forward.1} parent=11 // pred_check
          %p459 = pneg %p121
        $region18: #{bert_encoder_forward.1} parent=11 // pred_check_branch
          %461 = sbr.rel (%p459) target = $region20
        $region19: #{bert_encoder_forward.1} parent=11 // pred_region
          _
        $region20: #{bert_encoder_forward.1} parent=11 // pred_fallthru
          _
        // Predicated region
        $region21: #{bert_encoder_forward.1} parent=11 // pred_check
          %p462 = pneg %p142
        $region22: #{bert_encoder_forward.1} parent=11 // pred_check_branch
          %464 = sbr.rel (%p462) target = $region24
        $region23: #{bert_encoder_forward.1} parent=11 // pred_region
          _
        $region24: #{bert_encoder_forward.1} parent=11 // pred_fallthru
          _
        // Predicated region
        $region25: #{bert_encoder_forward.1} parent=11 // pred_check
          %p465 = pneg %p163
        $region26: #{bert_encoder_forward.1} parent=11 // pred_check_branch
          %467 = sbr.rel (%p465) target = $region28
        $region27: #{bert_encoder_forward.1} parent=11 // pred_region
          _
        $region28: #{bert_encoder_forward.1} parent=11 // pred_fallthru
          _
        // Predicated region
        $region29: #{bert_encoder_forward.1} parent=11 // pred_check
          %p468 = pneg %p184
        $region30: #{bert_encoder_forward.1} parent=11 // pred_check_branch
          %470 = sbr.rel (%p468) target = $region32
        $region31: #{bert_encoder_forward.1} parent=11 // pred_region
          _
        $region32: #{bert_encoder_forward.1} parent=11 // pred_fallthru
          _
        // Predicated region
        $region33: #{bert_encoder_forward.1} parent=11 // pred_check
          %p471 = pneg %p205
        $region34: #{bert_encoder_forward.1} parent=11 // pred_check_branch
          %473 = sbr.rel (%p471) target = $region36
        $region35: #{bert_encoder_forward.1} parent=11 // pred_region
          _
        $region36: #{bert_encoder_forward.1} parent=11 // pred_fallthru
          _
        // Predicated region
        $region37: #{bert_encoder_forward.1} parent=11 // pred_check
          %p474 = pneg %p226
        $region38: #{bert_encoder_forward.1} parent=11 // pred_check_branch
          %476 = sbr.rel (%p474) target = $region40
        $region39: #{bert_encoder_forward.1} parent=11 // pred_region
          _
        $region40: #{bert_encoder_forward.1} parent=11 // pred_fallthru
          _
        // Predicated region
        $region41: #{bert_encoder_forward.1} parent=11 // pred_check
          %p477 = pneg %p247
        $region42: #{bert_encoder_forward.1} parent=11 // pred_check_branch
          %479 = sbr.rel (%p477) target = $region44
        $region43: #{bert_encoder_forward.1} parent=11 // pred_region
          _
        $region44: #{bert_encoder_forward.1} parent=11 // pred_fallthru
          _
        // Predicated region
        $region45: #{bert_encoder_forward.1} parent=11 // pred_check
          %p480 = pneg %p268
        $region46: #{bert_encoder_forward.1} parent=11 // pred_check_branch
          %482 = sbr.rel (%p480) target = $region48
        $region47: #{bert_encoder_forward.1} parent=11 // pred_region
          _
        $region48: #{bert_encoder_forward.1} parent=11 // pred_fallthru
          _
        // Predicated region
        $region49: #{bert_encoder_forward.1} parent=11 // pred_check
          %p483 = pneg %p289
        $region50: #{bert_encoder_forward.1} parent=11 // pred_check_branch
          %485 = sbr.rel (%p483) target = $region52
        $region51: #{bert_encoder_forward.1} parent=11 // pred_region
          _
        $region52: #{bert_encoder_forward.1} parent=11 // pred_fallthru
          _
        // Predicated region
        $region53: #{bert_encoder_forward.1} parent=11 // pred_check
          %p486 = pneg %p310
        $region54: #{bert_encoder_forward.1} parent=11 // pred_check_branch
          %488 = sbr.rel (%p486) target = $region56
        $region55: #{bert_encoder_forward.1} parent=11 // pred_region
          _
        $region56: #{bert_encoder_forward.1} parent=11 // pred_fallthru
          _
        // Predicated region
        $region57: #{bert_encoder_forward.1} parent=11 // pred_check
          %p489 = pneg %p331
        $region58: #{bert_encoder_forward.1} parent=11 // pred_check_branch
          %491 = sbr.rel (%p489) target = $region60
        $region59: #{bert_encoder_forward.1} parent=11 // pred_region
          _
        $region60: #{bert_encoder_forward.1} parent=11 // pred_fallthru
          _
        // Predicated region
        $region61: #{bert_encoder_forward.1} parent=11 // pred_check
          %p492 = pneg %p352
        $region62: #{bert_encoder_forward.1} parent=11 // pred_check_branch
          %494 = sbr.rel (%p492) target = $region64
        $region63: #{bert_encoder_forward.1} parent=11 // pred_region
          _
        $region64: #{bert_encoder_forward.1} parent=11 // pred_fallthru
          _
        // Predicated region
        $region65: #{bert_encoder_forward.1} parent=11 // pred_check
          %p495 = pneg %p373
        $region66: #{bert_encoder_forward.1} parent=11 // pred_check_branch
          %497 = sbr.rel (%p495) target = $region68
        $region67: #{bert_encoder_forward.1} parent=11 // pred_region
          _
        $region68: #{bert_encoder_forward.1} parent=11 // pred_fallthru
          _
        // Predicated region
        $region69: #{bert_encoder_forward.1} parent=11 // pred_check
          %p498 = pneg %p394
        $region70: #{bert_encoder_forward.1} parent=11 // pred_check_branch
          %500 = sbr.rel (%p498) target = $region72
        $region71: #{bert_encoder_forward.1} parent=11 // pred_region
          _
        $region72: #{bert_encoder_forward.1} parent=11 // pred_fallthru
          _
        // Predicated region
        $region73: #{bert_encoder_forward.1} parent=11 // pred_check
          %p501 = pneg %p415
        $region74: #{bert_encoder_forward.1} parent=11 // pred_check_branch
          %503 = sbr.rel (%p501) target = $region76
        $region75: #{bert_encoder_forward.1} parent=11 // pred_region
          _
        $region76: #{bert_encoder_forward.1} parent=11 // pred_fallthru
          _
      $region12: #{bert_encoder_forward.1} parent=5 // pred_fallthru
        _
      %p504 = scmp.lt.s32.totalorder %s27, 2
      // Predicated region
      $region77: #{bert_encoder_forward.1} parent=5 // pred_check
        %p505 = pneg %p504
      $region78: #{bert_encoder_forward.1} parent=5 // pred_check_branch
        %507 = sbr.rel (%p505) target = $region80
      $region79: #{bert_encoder_forward.1} parent=5 // pred_region
        // Predicated region
        $region81: #{bert_encoder_forward.1} parent=79 // pred_check
          %p508 = pneg %p47
        $region82: #{bert_encoder_forward.1} parent=79 // pred_check_branch
          %510 = sbr.rel (%p508) target = $region84
        $region83: #{bert_encoder_forward.1} parent=79 // pred_region
          %p511 = scmp.lt.s32.totalorder %s27, 1
          %s512 = scalar_select %p511, %s27, 1
          %s513 = smul.addr %s512, 8
          %s514 = scalar_lea.vmem %s0, %s513
        $region84: #{bert_encoder_forward.1} parent=79 // pred_fallthru
          _
        // Predicated region
        $region85: #{bert_encoder_forward.1} parent=79 // pred_check
          %p515 = pneg %p73
        $region86: #{bert_encoder_forward.1} parent=79 // pred_check_branch
          %517 = sbr.rel (%p515) target = $region88
        $region87: #{bert_encoder_forward.1} parent=79 // pred_region
          %p518 = scmp.lt.s32.totalorder %s27, 1
          %s519 = scalar_select %p518, %s27, 1
          %s520 = scalar_lea.vmem %s1, %s519
        $region88: #{bert_encoder_forward.1} parent=79 // pred_fallthru
          _
      $region80: #{bert_encoder_forward.1} parent=5 // pred_fallthru
        _
      %p521 = scmp.le.s32.totalorder 1, %s27
      %p522 = scmp.lt.s32.totalorder %s27, 3
      %p523 = pnand %p521, %p522
      %p524 = pneg %p523
      // Predicated region
      $region89: #{bert_encoder_forward.1} parent=5 // pred_check
        _
      $region90: #{bert_encoder_forward.1} parent=5 // pred_check_branch
        %526 = sbr.rel (%p523) target = $region92
      $region91: #{bert_encoder_forward.1} parent=5 // pred_region
        %s527 = ssub.s32 %s27, 1
        %p528 = scmp.lt.s32.totalorder %s32, 1
        %s529 = scalar_select %p528, %s32, 1
        %s530 = smul.addr %s529, 8
        %s531 = scalar_lea.vmem %s0, %s530
        %p532 = pneg %p53
        %p533 = pneg %p50
        %p534 = scmp.lt.s32.totalorder %s32, 1
        %s535 = scalar_select %p534, %s32, 1
        %s536 = scalar_lea.vmem %s1, %s535
        %p537 = pneg %p79
        %p538 = pneg %p76
        %p539 = pneg %p100
        %p540 = pneg %p97
        %p541 = pneg %p121
        %p542 = pneg %p118
        %p543 = pneg %p142
        %p544 = pneg %p139
        %p545 = pneg %p163
        %p546 = pneg %p160
        %p547 = pneg %p184
        %p548 = pneg %p181
        %p549 = pneg %p205
        %p550 = pneg %p202
        %p551 = pneg %p226
        %p552 = pneg %p223
        %p553 = pneg %p247
        %p554 = pneg %p244
        %p555 = pneg %p268
        %p556 = pneg %p265
        %p557 = pneg %p289
        %p558 = pneg %p286
        %p559 = pneg %p310
        %p560 = pneg %p307
        %p561 = pneg %p331
        %p562 = pneg %p328
        %p563 = pneg %p352
        %p564 = pneg %p349
        %p565 = pneg %p373
        %p566 = pneg %p370
        %p567 = pneg %p394
        %p568 = pneg %p391
        %p569 = pneg %p415
        %p570 = pneg %p412
        %p571 = pneg %p441
        %p572 = pneg %p438
        %s573 = sand.u32 %s428, 1
        %s574 = scalar_lea.sflag [#allocation3], %s573
        %s575 = sand.u32 %s428, 1
        %s576 = scalar_lea.vmem [#allocation2], %s575
        %p577 = scmp.lt.s32.totalorder %s32, 1
        %s578 = scalar_select %p577, %s32, 1
        %s579 = smul.addr %s578, 8
        %s580 = scalar_lea.vmem %s0, %s579
        %p581 = scmp.lt.s32.totalorder %s32, 1
        %s582 = scalar_select %p581, %s32, 1
        %s583 = scalar_lea.vmem %s1, %s582
        %v585 = vld [vmem:[%s580] sm:$0xff]
        %v586 = vld [vmem:[%s2] sm:$0x1]
        %v587 = vld [vmem:[%s3] sm:$0x1]
        %vm588 = vcmask 261120
        %v589 = vsel %vm588, %v585, 0.0
        %590 = vadd.xlane.f32.xlu0 %v589
        %v591 = vpop.xlane.xlu0 %590
        %v592 = vrcp.pop 32.0
        %v593 = vmul.f32 32.0, %v592
        %v594 = vsub.f32 1.0, %v593
        %v595 = vmul.f32 %v592, %v594
        %v596 = vadd.f32 %v592, %v595
        %vm597 = vweird.f32 %v592
        %v598 = vsel %vm597, %v592, %v596
        %v599 = vmul.f32 %v591, %v598
        %v600 = vsub.f32 %v585, %v599
        %v601 = vmul.f32 %v600, %v600
        %v602 = vsel %vm588, %v601, 0.0
        %603 = vadd.xlane.f32.xlu0 %v602
        %v604 = vpop.xlane.xlu0 %603
        %v605 = vmul.f32 %v604, %v598
        %v606 = vadd.f32 %v605, 1e-12
        %v607 = vrsqrt.pop %v606
        %v608 = vmul.f32 %v607, %v606
        %v609 = vmul.f32 %v608, %v607
        %v610 = vmul.f32 0.5, %v609
        %v611 = vsub.f32 1.5, %v610
        %v612 = vmul.f32 %v607, %v611
        %vm613 = vweird.f32 %v606
        %vm614 = vweird.f32 %v607
        %vm615 = vmor %vm613, %vm614
        %v616 = vsel %vm615, %v607, %v612
        %v617 = vmul.f32 %v600, %v616
        %v619 = vperm.slane %v586, 0
        %v621 = vmul.f32 %v617, %v619
        %v623 = vperm.slane %v587, 0
        %v625 = vadd.f32 %v621, %v623
        %v626 = vld [vmem:[%s583] sm:$0x1]
        %v627 = vld [vmem:[%s4] sm:$0xf]
        %v628 = vld [vmem:[%s4 + $0x4] sm:$0xf]
        %v629 = vld [vmem:[%s4 + $0x8] sm:$0xf]
        %v630 = vld [vmem:[%s4 + $0xc] sm:$0xf]
        %v631 = vpack.c.bf16 %v625, %v625
        %v632 = vld [vmem:[%s5] sm:$0x1]
        %v634 = vperm.slane %v632, 0
        %v640 = vunpack.c.l.b16 %v627
        %v641 = vunpack.c.l.b16 %v628
        %v642 = vunpack.c.l.b16 %v629
        %v643 = vunpack.c.l.b16 %v630
        %v644 = vpack.c.b16 %v641, %v640
        %v645 = vpack.c.b16 %v643, %v642
        %v649 = vsel %vm588, %v631, 0
        %651 = vmatpush.bf16.msra.mxu0 0
        %652 = vmatpush.bf16.msra.mxu0 0
        %653 = vmatpush.bf16.msra.mxu0 0
        %654 = vmatpush.bf16.msra.mxu0 0
        %655 = vmatpush.bf16.msra.mxu0 0
        %656 = vmatpush.bf16.msra.mxu0 0
        %657 = vmatpush.bf16.msra.mxu0 %v645
        %658 = vmatpush.bf16.msra.mxu0 %v644
        %659 = vmatmul.bf16.gmra.mxu0 %v649
        %v660 = vpop.f32.mrf.mxu0
        %v661 = vadd.f32 %v634, %v660
        %v662 = vpop.f32.mrf.mxu0
        %663 = vdwg.mxu0
        %v664 = vpack.c.bf16 %v661, %v661
        %v666 = vperm.slane %v626, 0
        %669 = vrot.lane.b32.xlu0 %v664, 96
        %v670 = vpop.permute.xlu0 %669
        %vm671 = vcmask 130048
        %v673 = vsel %vm671, %v664, 0
        %v676 = vsel %vm671, %v670, 0
        %678 = vmatpush.bf16.xpose.msra.mxu0 0
        %679 = vmatpush.bf16.xpose.msra.mxu0 0
        %680 = vmatpush.bf16.xpose.msra.mxu0 0
        %681 = vmatpush.bf16.xpose.msra.mxu0 0
        %682 = vmatpush.bf16.xpose.msra.mxu0 0
        %683 = vmatpush.bf16.xpose.msra.mxu0 0
        %684 = vmatpush.bf16.xpose.msra.mxu0 0
        %685 = vmatpush.bf16.xpose.msra.mxu0 %v676
        %686 = vmatmul.bf16.gmra.mxu0 %v673
        %v687 = vpop.f32.mrf.mxu0
        %v688 = vadd.f32 %v666, %v687
        %v689 = vpop.f32.mrf.mxu0
        %690 = vdwg.mxu0
        %vm691 = vcmask 64512
        %v692 = vsel %vm691, %v688, -inf
        %693 = vmax.xlane.f32.xlu0 %v692
        %v694 = vpop.xlane.xlu0 %693
        %v695 = vsub.f32 %v688, %v694
        %v696 = vmul.f32 %v695, 1.442695
        %v697 = vpow.pop %v696
        %v698 = vsel %vm691, %v697, 0.0
        %699 = vadd.xlane.f32.xlu0 %v698
        %v700 = vpop.xlane.xlu0 %699
        %v701 = vrcp.pop %v700
        %v702 = vmul.f32 %v697, %v701
        %v703 = vpack.c.bf16 %v702, %v702
        %704 = vrot.lane.b32.xlu0 %v664, 64
        %v705 = vpop.permute.xlu0 %704
        %v707 = vsel %vm691, %v703, 0
        %vm709 = vcmask 1043456
        %v711 = vsel %vm709, %v705, 0
        %713 = vmatpush.bf16.msra.mxu0 0
        %714 = vmatpush.bf16.msra.mxu0 0
        %715 = vmatpush.bf16.msra.mxu0 0
        %716 = vmatpush.bf16.msra.mxu0 0
        %717 = vmatpush.bf16.msra.mxu0 0
        %718 = vmatpush.bf16.msra.mxu0 0
        %719 = vmatpush.bf16.msra.mxu0 0
        %720 = vmatpush.bf16.msra.mxu0 %v711
        %721 = vmatmul.bf16.gmra.mxu0 %v707
        %v722 = vpop.f32.mrf.mxu0
        %v723 = vadd.f32 0.0, %v722
        %v724 = vpop.f32.mrf.mxu0
        %725 = vdwg.mxu0
        %726 = vrot.lane.b32.xlu0 %v664, 112
        %v727 = vpop.permute.xlu0 %726
        %728 = vrot.lane.b32.xlu0 %v664, 80
        %v729 = vpop.permute.xlu0 %728
        %v731 = vsel %vm671, %v727, 0
        %v734 = vsel %vm671, %v729, 0
        %736 = vmatpush.bf16.xpose.msra.mxu0 0
        %737 = vmatpush.bf16.xpose.msra.mxu0 0
        %738 = vmatpush.bf16.xpose.msra.mxu0 0
        %739 = vmatpush.bf16.xpose.msra.mxu0 0
        %740 = vmatpush.bf16.xpose.msra.mxu0 0
        %741 = vmatpush.bf16.xpose.msra.mxu0 0
        %742 = vmatpush.bf16.xpose.msra.mxu0 0
        %743 = vmatpush.bf16.xpose.msra.mxu0 %v734
        %744 = vmatmul.bf16.gmra.mxu0 %v731
        %v745 = vpop.f32.mrf.mxu0
        %v746 = vadd.f32 %v666, %v745
        %v747 = vpop.f32.mrf.mxu0
        %748 = vdwg.mxu0
        %v749 = vsel %vm691, %v746, -inf
        %750 = vmax.xlane.f32.xlu0 %v749
        %v751 = vpop.xlane.xlu0 %750
        %v752 = vsub.f32 %v746, %v751
        %v753 = vmul.f32 %v752, 1.442695
        %v754 = vpow.pop %v753
        %v755 = vsel %vm691, %v754, 0.0
        %756 = vadd.xlane.f32.xlu0 %v755
        %v757 = vpop.xlane.xlu0 %756
        %v758 = vrcp.pop %v757
        %v759 = vmul.f32 %v754, %v758
        %v760 = vpack.c.bf16 %v759, %v759
        %761 = vrot.lane.b32.xlu0 %v664, 48
        %v762 = vpop.permute.xlu0 %761
        %v764 = vsel %vm691, %v760, 0
        %v767 = vsel %vm709, %v762, 0
        %769 = vmatpush.bf16.msra.mxu0 0
        %770 = vmatpush.bf16.msra.mxu0 0
        %771 = vmatpush.bf16.msra.mxu0 0
        %772 = vmatpush.bf16.msra.mxu0 0
        %773 = vmatpush.bf16.msra.mxu0 0
        %774 = vmatpush.bf16.msra.mxu0 0
        %775 = vmatpush.bf16.msra.mxu0 0
        %776 = vmatpush.bf16.msra.mxu0 %v767
        %777 = vmatmul.bf16.gmra.mxu0 %v764
        %v778 = vpop.f32.mrf.mxu0
        %v779 = vadd.f32 0.0, %v778
        %v780 = vpop.f32.mrf.mxu0
        %781 = vdwg.mxu0
        %783 = vrot.lane.b32.xlu0 %v779, 16
        %v784 = vpop.permute.xlu0 %783
        %v786 = vsel %vm671, %v723, %v784
        %v787 = vld [vmem:[%s6] sm:$0xf]
        %v788 = vld [vmem:[%s6 + $0x4] sm:$0xf]
        %v789 = vld [vmem:[%s6 + $0x8] sm:$0xf]
        %v790 = vld [vmem:[%s6 + $0xc] sm:$0xf]
        %v791 = vpack.c.bf16 %v786, %v786
        %v792 = vld [vmem:[%s7] sm:$0x1]
        %v794 = vperm.slane %v792, 0
        %v800 = vunpack.c.l.b16 %v787
        %v801 = vunpack.c.l.b16 %v788
        %v802 = vunpack.c.l.b16 %v789
        %v803 = vunpack.c.l.b16 %v790
        %v804 = vpack.c.b16 %v801, %v800
        %v805 = vpack.c.b16 %v803, %v802
        %v809 = vsel %vm588, %v791, 0
        %811 = vmatpush.bf16.msra.mxu0 0
        %812 = vmatpush.bf16.msra.mxu0 0
        %813 = vmatpush.bf16.msra.mxu0 0
        %814 = vmatpush.bf16.msra.mxu0 0
        %815 = vmatpush.bf16.msra.mxu0 0
        %816 = vmatpush.bf16.msra.mxu0 0
        %817 = vmatpush.bf16.msra.mxu0 %v805
        %818 = vmatpush.bf16.msra.mxu0 %v804
        %819 = vmatmul.bf16.gmra.mxu0 %v809
        %v820 = vpop.f32.mrf.mxu0
        %v821 = vadd.f32 %v794, %v820
        %v822 = vpop.f32.mrf.mxu0
        %823 = vdwg.mxu0
        %v824 = vadd.f32 %v821, %v625
        %v825 = vld [vmem:[%s8] sm:$0x1]
        %v826 = vld [vmem:[%s9] sm:$0x1]
        %v827 = vsel %vm588, %v824, 0.0
        %828 = vadd.xlane.f32.xlu0 %v827
        %v829 = vpop.xlane.xlu0 %828
        %v830 = vmul.f32 %v829, %v598
        %v831 = vsub.f32 %v824, %v830
        %v832 = vmul.f32 %v831, %v831
        %v833 = vsel %vm588, %v832, 0.0
        %834 = vadd.xlane.f32.xlu0 %v833
        %v835 = vpop.xlane.xlu0 %834
        %v836 = vmul.f32 %v835, %v598
        %v837 = vadd.f32 %v836, 1e-12
        %v838 = vrsqrt.pop %v837
        %v839 = vmul.f32 %v838, %v837
        %v840 = vmul.f32 %v839, %v838
        %v841 = vmul.f32 0.5, %v840
        %v842 = vsub.f32 1.5, %v841
        %v843 = vmul.f32 %v838, %v842
        %vm844 = vweird.f32 %v837
        %vm845 = vweird.f32 %v838
        %vm846 = vmor %vm844, %vm845
        %v847 = vsel %vm846, %v838, %v843
        %v848 = vmul.f32 %v831, %v847
        %v850 = vperm.slane %v825, 0
        %v852 = vmul.f32 %v848, %v850
        %v854 = vperm.slane %v826, 0
        %v856 = vadd.f32 %v852, %v854
        %v857 = vld [vmem:[%s10] sm:$0xf]
        %v858 = vld [vmem:[%s10 + $0x4] sm:$0xf]
        %v859 = vld [vmem:[%s10 + $0x8] sm:$0xf]
        %v860 = vld [vmem:[%s10 + $0xc] sm:$0xf]
        %v861 = vpack.c.bf16 %v856, %v856
        %v862 = vld [vmem:[%s11] sm:$0x1]
        %v864 = vperm.slane %v862, 0
        %v870 = vunpack.c.l.b16 %v857
        %v871 = vunpack.c.l.b16 %v858
        %v872 = vunpack.c.l.b16 %v859
        %v873 = vunpack.c.l.b16 %v860
        %v874 = vpack.c.b16 %v871, %v870
        %v875 = vpack.c.b16 %v873, %v872
        %v879 = vsel %vm588, %v861, 0
        %881 = vmatpush.bf16.msra.mxu0 0
        %882 = vmatpush.bf16.msra.mxu0 0
        %883 = vmatpush.bf16.msra.mxu0 0
        %884 = vmatpush.bf16.msra.mxu0 0
        %885 = vmatpush.bf16.msra.mxu0 0
        %886 = vmatpush.bf16.msra.mxu0 0
        %887 = vmatpush.bf16.msra.mxu0 %v875
        %888 = vmatpush.bf16.msra.mxu0 %v874
        %889 = vmatmul.bf16.gmra.mxu0 %v879
        %v890 = vpop.f32.mrf.mxu0
        %v891 = vadd.f32 %v864, %v890
        %v892 = vpop.f32.mrf.mxu0
        %893 = vdwg.mxu0
        %v894 = vmul.f32 %v891, 0.5
        %v895 = vmul.f32 %v891, 0.044715
        %v896 = vmul.f32 %v895, %v891
        %v897 = vmul.f32 %v896, %v891
        %v898 = vadd.f32 %v891, %v897
        %v899 = vmul.f32 %v898, 0.7978846
        %v900 = vtanh.pop %v899
        %v901 = vadd.f32 %v900, 1.0
        %v902 = vmul.f32 %v894, %v901
        %v903 = vld [vmem:[%s12] sm:$0xf]
        %v904 = vld [vmem:[%s12 + $0x4] sm:$0xf]
        %v905 = vld [vmem:[%s12 + $0x8] sm:$0xf]
        %v906 = vld [vmem:[%s12 + $0xc] sm:$0xf]
        %v907 = vld [vmem:[%s12 + $0x10] sm:$0xf]
        %v908 = vld [vmem:[%s12 + $0x14] sm:$0xf]
        %v909 = vld [vmem:[%s12 + $0x18] sm:$0xf]
        %v910 = vld [vmem:[%s12 + $0x1c] sm:$0xf]
        %v911 = vpack.c.bf16 %v902, %v902
        %v912 = vld [vmem:[%s13] sm:$0x1]
        %v914 = vperm.slane %v912, 0
        %v924 = vunpack.c.l.b16 %v903
        %v925 = vunpack.c.l.b16 %v904
        %v926 = vunpack.c.l.b16 %v905
        %v927 = vunpack.c.l.b16 %v906
        %v928 = vunpack.c.l.b16 %v907
        %v929 = vunpack.c.l.b16 %v908
        %v930 = vunpack.c.l.b16 %v909
        %v931 = vunpack.c.l.b16 %v910
        %v932 = vpack.c.b16 %v925, %v924
        %v933 = vpack.c.b16 %v927, %v926
        %v934 = vpack.c.b16 %v929, %v928
        %v935 = vpack.c.b16 %v931, %v930
        %vm940 = vcmask 523264
        %v942 = vsel %vm940, %v911, 0
        %944 = vmatpush.bf16.msra.mxu0 0
        %945 = vmatpush.bf16.msra.mxu0 0
        %946 = vmatpush.bf16.msra.mxu0 0
        %947 = vmatpush.bf16.msra.mxu0 0
        %948 = vmatpush.bf16.msra.mxu0 %v935
        %949 = vmatpush.bf16.msra.mxu0 %v934
        %950 = vmatpush.bf16.msra.mxu0 %v933
        %951 = vmatpush.bf16.msra.mxu0 %v932
        %952 = vmatmul.bf16.gmra.mxu0 %v942
        %v953 = vpop.f32.mrf.mxu0
        %v954 = vadd.f32 %v914, %v953
        %v955 = vpop.f32.mrf.mxu0
        %956 = vdwg.mxu0
        %v957 = vadd.f32 %v954, %v856
        %v958 = vld [vmem:[%s14] sm:$0x1]
        %v959 = vld [vmem:[%s15] sm:$0x1]
        %v960 = vsel %vm588, %v957, 0.0
        %961 = vadd.xlane.f32.xlu0 %v960
        %v962 = vpop.xlane.xlu0 %961
        %v963 = vmul.f32 %v962, %v598
        %v964 = vsub.f32 %v957, %v963
        %v965 = vmul.f32 %v964, %v964
        %v966 = vsel %vm588, %v965, 0.0
        %967 = vadd.xlane.f32.xlu0 %v966
        %v968 = vpop.xlane.xlu0 %967
        %v969 = vmul.f32 %v968, %v598
        %v970 = vadd.f32 %v969, 1e-12
        %v971 = vrsqrt.pop %v970
        %v972 = vmul.f32 %v971, %v970
        %v973 = vmul.f32 %v972, %v971
        %v974 = vmul.f32 0.5, %v973
        %v975 = vsub.f32 1.5, %v974
        %v976 = vmul.f32 %v971, %v975
        %vm977 = vweird.f32 %v970
        %vm978 = vweird.f32 %v971
        %vm979 = vmor %vm977, %vm978
        %v980 = vsel %vm979, %v971, %v976
        %v981 = vmul.f32 %v964, %v980
        %v983 = vperm.slane %v958, 0
        %v985 = vmul.f32 %v981, %v983
        %v987 = vperm.slane %v959, 0
        %v989 = vadd.f32 %v985, %v987
        %s990 = scalar_lea.vmem %s4, 16
        %v991 = vld [vmem:[%s990] sm:$0xf]
        %v992 = vld [vmem:[%s990 + $0x4] sm:$0xf]
        %v993 = vld [vmem:[%s990 + $0x8] sm:$0xf]
        %v994 = vld [vmem:[%s990 + $0xc] sm:$0xf]
        %v995 = vpack.c.bf16 %v989, %v989
        %s996 = scalar_lea.vmem %s5, 1
        %v997 = vld [vmem:[%s996] sm:$0x1]
        %v999 = vperm.slane %v997, 0
        %v1005 = vunpack.c.l.b16 %v991
        %v1006 = vunpack.c.l.b16 %v992
        %v1007 = vunpack.c.l.b16 %v993
        %v1008 = vunpack.c.l.b16 %v994
        %v1009 = vpack.c.b16 %v1006, %v1005
        %v1010 = vpack.c.b16 %v1008, %v1007
        %v1014 = vsel %vm588, %v995, 0
        %1016 = vmatpush.bf16.msra.mxu0 0
        %1017 = vmatpush.bf16.msra.mxu0 0
        %1018 = vmatpush.bf16.msra.mxu0 0
        %1019 = vmatpush.bf16.msra.mxu0 0
        %1020 = vmatpush.bf16.msra.mxu0 0
        %1021 = vmatpush.bf16.msra.mxu0 0
        %1022 = vmatpush.bf16.msra.mxu0 %v1010
        %1023 = vmatpush.bf16.msra.mxu0 %v1009
        %1024 = vmatmul.bf16.gmra.mxu0 %v1014
        %v1025 = vpop.f32.mrf.mxu0
        %v1026 = vadd.f32 %v999, %v1025
        %v1027 = vpop.f32.mrf.mxu0
        %1028 = vdwg.mxu0
        %v1029 = vpack.c.bf16 %v1026, %v1026
        %1031 = vrot.lane.b32.xlu0 %v1029, 96
        %v1032 = vpop.permute.xlu0 %1031
        %v1034 = vsel %vm671, %v1029, 0
        %v1037 = vsel %vm671, %v1032, 0
        %1039 = vmatpush.bf16.xpose.msra.mxu0 0
        %1040 = vmatpush.bf16.xpose.msra.mxu0 0
        %1041 = vmatpush.bf16.xpose.msra.mxu0 0
        %1042 = vmatpush.bf16.xpose.msra.mxu0 0
        %1043 = vmatpush.bf16.xpose.msra.mxu0 0
        %1044 = vmatpush.bf16.xpose.msra.mxu0 0
        %1045 = vmatpush.bf16.xpose.msra.mxu0 0
        %1046 = vmatpush.bf16.xpose.msra.mxu0 %v1037
        %1047 = vmatmul.bf16.gmra.mxu0 %v1034
        %v1048 = vpop.f32.mrf.mxu0
        %v1049 = vadd.f32 %v666, %v1048
        %v1050 = vpop.f32.mrf.mxu0
        %1051 = vdwg.mxu0
        %v1052 = vsel %vm691, %v1049, -inf
        %1053 = vmax.xlane.f32.xlu0 %v1052
        %v1054 = vpop.xlane.xlu0 %1053
        %v1055 = vsub.f32 %v1049, %v1054
        %v1056 = vmul.f32 %v1055, 1.442695
        %v1057 = vpow.pop %v1056
        %v1058 = vsel %vm691, %v1057, 0.0
        %1059 = vadd.xlane.f32.xlu0 %v1058
        %v1060 = vpop.xlane.xlu0 %1059
        %v1061 = vrcp.pop %v1060
        %v1062 = vmul.f32 %v1057, %v1061
        %v1063 = vpack.c.bf16 %v1062, %v1062
        %1064 = vrot.lane.b32.xlu0 %v1029, 64
        %v1065 = vpop.permute.xlu0 %1064
        %v1067 = vsel %vm691, %v1063, 0
        %v1070 = vsel %vm709, %v1065, 0
        %1072 = vmatpush.bf16.msra.mxu0 0
        %1073 = vmatpush.bf16.msra.mxu0 0
        %1074 = vmatpush.bf16.msra.mxu0 0
        %1075 = vmatpush.bf16.msra.mxu0 0
        %1076 = vmatpush.bf16.msra.mxu0 0
        %1077 = vmatpush.bf16.msra.mxu0 0
        %1078 = vmatpush.bf16.msra.mxu0 0
        %1079 = vmatpush.bf16.msra.mxu0 %v1070
        %1080 = vmatmul.bf16.gmra.mxu0 %v1067
        %v1081 = vpop.f32.mrf.mxu0
        %v1082 = vadd.f32 0.0, %v1081
        %v1083 = vpop.f32.mrf.mxu0
        %1084 = vdwg.mxu0
        %1085 = vrot.lane.b32.xlu0 %v1029, 112
        %v1086 = vpop.permute.xlu0 %1085
        %1087 = vrot.lane.b32.xlu0 %v1029, 80
        %v1088 = vpop.permute.xlu0 %1087
        %v1090 = vsel %vm671, %v1086, 0
        %v1093 = vsel %vm671, %v1088, 0
        %1095 = vmatpush.bf16.xpose.msra.mxu0 0
        %1096 = vmatpush.bf16.xpose.msra.mxu0 0
        %1097 = vmatpush.bf16.xpose.msra.mxu0 0
        %1098 = vmatpush.bf16.xpose.msra.mxu0 0
        %1099 = vmatpush.bf16.xpose.msra.mxu0 0
        %1100 = vmatpush.bf16.xpose.msra.mxu0 0
        %1101 = vmatpush.bf16.xpose.msra.mxu0 0
        %1102 = vmatpush.bf16.xpose.msra.mxu0 %v1093
        %1103 = vmatmul.bf16.gmra.mxu0 %v1090
        %v1104 = vpop.f32.mrf.mxu0
        %v1105 = vadd.f32 %v666, %v1104
        %v1106 = vpop.f32.mrf.mxu0
        %1107 = vdwg.mxu0
        %v1108 = vsel %vm691, %v1105, -inf
        %1109 = vmax.xlane.f32.xlu0 %v1108
        %v1110 = vpop.xlane.xlu0 %1109
        %v1111 = vsub.f32 %v1105, %v1110
        %v1112 = vmul.f32 %v1111, 1.442695
        %v1113 = vpow.pop %v1112
        %v1114 = vsel %vm691, %v1113, 0.0
        %1115 = vadd.xlane.f32.xlu0 %v1114
        %v1116 = vpop.xlane.xlu0 %1115
        %v1117 = vrcp.pop %v1116
        %v1118 = vmul.f32 %v1113, %v1117
        %v1119 = vpack.c.bf16 %v1118, %v1118
        %1120 = vrot.lane.b32.xlu0 %v1029, 48
        %v1121 = vpop.permute.xlu0 %1120
        %v1123 = vsel %vm691, %v1119, 0
        %v1126 = vsel %vm709, %v1121, 0
        %1128 = vmatpush.bf16.msra.mxu0 0
        %1129 = vmatpush.bf16.msra.mxu0 0
        %1130 = vmatpush.bf16.msra.mxu0 0
        %1131 = vmatpush.bf16.msra.mxu0 0
        %1132 = vmatpush.bf16.msra.mxu0 0
        %1133 = vmatpush.bf16.msra.mxu0 0
        %1134 = vmatpush.bf16.msra.mxu0 0
        %1135 = vmatpush.bf16.msra.mxu0 %v1126
        %1136 = vmatmul.bf16.gmra.mxu0 %v1123
        %v1137 = vpop.f32.mrf.mxu0
        %v1138 = vadd.f32 0.0, %v1137
        %v1139 = vpop.f32.mrf.mxu0
        %1140 = vdwg.mxu0
        %1142 = vrot.lane.b32.xlu0 %v1138, 16
        %v1143 = vpop.permute.xlu0 %1142
        %v1145 = vsel %vm671, %v1082, %v1143
        %s1146 = scalar_lea.vmem %s6, 16
        %v1147 = vld [vmem:[%s1146] sm:$0xf]
        %v1148 = vld [vmem:[%s1146 + $0x4] sm:$0xf]
        %v1149 = vld [vmem:[%s1146 + $0x8] sm:$0xf]
        %v1150 = vld [vmem:[%s1146 + $0xc] sm:$0xf]
        %v1151 = vpack.c.bf16 %v1145, %v1145
        %s1152 = scalar_lea.vmem %s7, 1
        %v1153 = vld [vmem:[%s1152] sm:$0x1]
        %v1155 = vperm.slane %v1153, 0
        %v1161 = vunpack.c.l.b16 %v1147
        %v1162 = vunpack.c.l.b16 %v1148
        %v1163 = vunpack.c.l.b16 %v1149
        %v1164 = vunpack.c.l.b16 %v1150
        %v1165 = vpack.c.b16 %v1162, %v1161
        %v1166 = vpack.c.b16 %v1164, %v1163
        %v1170 = vsel %vm588, %v1151, 0
        %1172 = vmatpush.bf16.msra.mxu0 0
        %1173 = vmatpush.bf16.msra.mxu0 0
        %1174 = vmatpush.bf16.msra.mxu0 0
        %1175 = vmatpush.bf16.msra.mxu0 0
        %1176 = vmatpush.bf16.msra.mxu0 0
        %1177 = vmatpush.bf16.msra.mxu0 0
        %1178 = vmatpush.bf16.msra.mxu0 %v1166
        %1179 = vmatpush.bf16.msra.mxu0 %v1165
        %1180 = vmatmul.bf16.gmra.mxu0 %v1170
        %v1181 = vpop.f32.mrf.mxu0
        %v1182 = vadd.f32 %v1155, %v1181
        %v1183 = vpop.f32.mrf.mxu0
        %1184 = vdwg.mxu0
        %v1185 = vadd.f32 %v1182, %v989
        %s1186 = scalar_lea.vmem %s8, 1
        %v1187 = vld [vmem:[%s1186] sm:$0x1]
        %s1188 = scalar_lea.vmem %s9, 1
        %v1189 = vld [vmem:[%s1188] sm:$0x1]
        %v1190 = vsel %vm588, %v1185, 0.0
        %1191 = vadd.xlane.f32.xlu0 %v1190
        %v1192 = vpop.xlane.xlu0 %1191
        %v1193 = vmul.f32 %v1192, %v598
        %v1194 = vsub.f32 %v1185, %v1193
        %v1195 = vmul.f32 %v1194, %v1194
        %v1196 = vsel %vm588, %v1195, 0.0
        %1197 = vadd.xlane.f32.xlu0 %v1196
        %v1198 = vpop.xlane.xlu0 %1197
        %v1199 = vmul.f32 %v1198, %v598
        %v1200 = vadd.f32 %v1199, 1e-12
        %v1201 = vrsqrt.pop %v1200
        %v1202 = vmul.f32 %v1201, %v1200
        %v1203 = vmul.f32 %v1202, %v1201
        %v1204 = vmul.f32 0.5, %v1203
        %v1205 = vsub.f32 1.5, %v1204
        %v1206 = vmul.f32 %v1201, %v1205
        %vm1207 = vweird.f32 %v1200
        %vm1208 = vweird.f32 %v1201
        %vm1209 = vmor %vm1207, %vm1208
        %v1210 = vsel %vm1209, %v1201, %v1206
        %v1211 = vmul.f32 %v1194, %v1210
        %v1213 = vperm.slane %v1187, 0
        %v1215 = vmul.f32 %v1211, %v1213
        %v1217 = vperm.slane %v1189, 0
        %v1219 = vadd.f32 %v1215, %v1217
        %s1220 = scalar_lea.vmem %s10, 16
        %v1221 = vld [vmem:[%s1220] sm:$0xf]
        %v1222 = vld [vmem:[%s1220 + $0x4] sm:$0xf]
        %v1223 = vld [vmem:[%s1220 + $0x8] sm:$0xf]
        %v1224 = vld [vmem:[%s1220 + $0xc] sm:$0xf]
        %v1225 = vpack.c.bf16 %v1219, %v1219
        %s1226 = scalar_lea.vmem %s11, 1
        %v1227 = vld [vmem:[%s1226] sm:$0x1]
        %v1229 = vperm.slane %v1227, 0
        %v1235 = vunpack.c.l.b16 %v1221
        %v1236 = vunpack.c.l.b16 %v1222
        %v1237 = vunpack.c.l.b16 %v1223
        %v1238 = vunpack.c.l.b16 %v1224
        %v1239 = vpack.c.b16 %v1236, %v1235
        %v1240 = vpack.c.b16 %v1238, %v1237
        %v1244 = vsel %vm588, %v1225, 0
        %1246 = vmatpush.bf16.msra.mxu0 0
        %1247 = vmatpush.bf16.msra.mxu0 0
        %1248 = vmatpush.bf16.msra.mxu0 0
        %1249 = vmatpush.bf16.msra.mxu0 0
        %1250 = vmatpush.bf16.msra.mxu0 0
        %1251 = vmatpush.bf16.msra.mxu0 0
        %1252 = vmatpush.bf16.msra.mxu0 %v1240
        %1253 = vmatpush.bf16.msra.mxu0 %v1239
        %1254 = vmatmul.bf16.gmra.mxu0 %v1244
        %v1255 = vpop.f32.mrf.mxu0
        %v1256 = vadd.f32 %v1229, %v1255
        %v1257 = vpop.f32.mrf.mxu0
        %1258 = vdwg.mxu0
        %v1259 = vmul.f32 %v1256, 0.5
        %v1260 = vmul.f32 %v1256, 0.044715
        %v1261 = vmul.f32 %v1260, %v1256
        %v1262 = vmul.f32 %v1261, %v1256
        %v1263 = vadd.f32 %v1256, %v1262
        %v1264 = vmul.f32 %v1263, 0.7978846
        %v1265 = vtanh.pop %v1264
        %v1266 = vadd.f32 %v1265, 1.0
        %v1267 = vmul.f32 %v1259, %v1266
        %s1268 = scalar_lea.vmem %s12, 32
        %v1269 = vld [vmem:[%s1268] sm:$0xf]
        %v1270 = vld [vmem:[%s1268 + $0x4] sm:$0xf]
        %v1271 = vld [vmem:[%s1268 + $0x8] sm:$0xf]
        %v1272 = vld [vmem:[%s1268 + $0xc] sm:$0xf]
        %v1273 = vld [vmem:[%s1268 + $0x10] sm:$0xf]
        %v1274 = vld [vmem:[%s1268 + $0x14] sm:$0xf]
        %v1275 = vld [vmem:[%s1268 + $0x18] sm:$0xf]
        %v1276 = vld [vmem:[%s1268 + $0x1c] sm:$0xf]
        %v1277 = vpack.c.bf16 %v1267, %v1267
        %s1278 = scalar_lea.vmem %s13, 1
        %v1279 = vld [vmem:[%s1278] sm:$0x1]
        %v1281 = vperm.slane %v1279, 0
        %v1291 = vunpack.c.l.b16 %v1269
        %v1292 = vunpack.c.l.b16 %v1270
        %v1293 = vunpack.c.l.b16 %v1271
        %v1294 = vunpack.c.l.b16 %v1272
        %v1295 = vunpack.c.l.b16 %v1273
        %v1296 = vunpack.c.l.b16 %v1274
        %v1297 = vunpack.c.l.b16 %v1275
        %v1298 = vunpack.c.l.b16 %v1276
        %v1299 = vpack.c.b16 %v1292, %v1291
        %v1300 = vpack.c.b16 %v1294, %v1293
        %v1301 = vpack.c.b16 %v1296, %v1295
        %v1302 = vpack.c.b16 %v1298, %v1297
        %v1308 = vsel %vm940, %v1277, 0
        %1310 = vmatpush.bf16.msra.mxu0 0
        %1311 = vmatpush.bf16.msra.mxu0 0
        %1312 = vmatpush.bf16.msra.mxu0 0
        %1313 = vmatpush.bf16.msra.mxu0 0
        %1314 = vmatpush.bf16.msra.mxu0 %v1302
        %1315 = vmatpush.bf16.msra.mxu0 %v1301
        %1316 = vmatpush.bf16.msra.mxu0 %v1300
        %1317 = vmatpush.bf16.msra.mxu0 %v1299
        %1318 = vmatmul.bf16.gmra.mxu0 %v1308
        %v1319 = vpop.f32.mrf.mxu0
        %v1320 = vadd.f32 %v1281, %v1319
        %v1321 = vpop.f32.mrf.mxu0
        %1322 = vdwg.mxu0
        %v1323 = vadd.f32 %v1320, %v1219
        %s1324 = scalar_lea.vmem %s14, 1
        %v1325 = vld [vmem:[%s1324] sm:$0x1]
        %s1326 = scalar_lea.vmem %s15, 1
        %v1327 = vld [vmem:[%s1326] sm:$0x1]
        %v1328 = vsel %vm588, %v1323, 0.0
        %1329 = vadd.xlane.f32.xlu0 %v1328
        %v1330 = vpop.xlane.xlu0 %1329
        %v1331 = vmul.f32 %v1330, %v598
        %v1332 = vsub.f32 %v1323, %v1331
        %v1333 = vmul.f32 %v1332, %v1332
        %v1334 = vsel %vm588, %v1333, 0.0
        %1335 = vadd.xlane.f32.xlu0 %v1334
        %v1336 = vpop.xlane.xlu0 %1335
        %v1337 = vmul.f32 %v1336, %v598
        %v1338 = vadd.f32 %v1337, 1e-12
        %v1339 = vrsqrt.pop %v1338
        %v1340 = vmul.f32 %v1339, %v1338
        %v1341 = vmul.f32 %v1340, %v1339
        %v1342 = vmul.f32 0.5, %v1341
        %v1343 = vsub.f32 1.5, %v1342
        %v1344 = vmul.f32 %v1339, %v1343
        %vm1345 = vweird.f32 %v1338
        %vm1346 = vweird.f32 %v1339
        %vm1347 = vmor %vm1345, %vm1346
        %v1348 = vsel %vm1347, %v1339, %v1344
        %v1349 = vmul.f32 %v1332, %v1348
        %v1351 = vperm.slane %v1325, 0
        %v1353 = vmul.f32 %v1349, %v1351
        %v1355 = vperm.slane %v1327, 0
        %v1357 = vadd.f32 %v1353, %v1355
        %v1358 = vld [vmem:[%s16] sm:$0xf]
        %v1359 = vld [vmem:[%s16 + $0x4] sm:$0xf]
        %v1360 = vld [vmem:[%s16 + $0x8] sm:$0xf]
        %v1361 = vld [vmem:[%s16 + $0xc] sm:$0xf]
        %v1362 = vpack.c.bf16 %v1357, %v1357
        %v1363 = vld [vmem:[%s17] sm:$0x1]
        %v1368 = vunpack.c.l.b16 %v1358
        %v1369 = vunpack.c.l.b16 %v1359
        %v1370 = vunpack.c.l.b16 %v1360
        %v1371 = vunpack.c.l.b16 %v1361
        %v1372 = vpack.c.b16 %v1369, %v1368
        %v1373 = vpack.c.b16 %v1371, %v1370
        %v1377 = vsel %vm588, %v1362, 0
        %1379 = vmatpush.bf16.msra.mxu0 0
        %1380 = vmatpush.bf16.msra.mxu0 0
        %1381 = vmatpush.bf16.msra.mxu0 0
        %1382 = vmatpush.bf16.msra.mxu0 0
        %1383 = vmatpush.bf16.msra.mxu0 0
        %1384 = vmatpush.bf16.msra.mxu0 0
        %1385 = vmatpush.bf16.msra.mxu0 %v1373
        %1386 = vmatpush.bf16.msra.mxu0 %v1372
        %1387 = vmatmul.bf16.gmra.mxu0 %v1377
        %v1388 = vpop.f32.mrf.mxu0
        %v1389 = vadd.f32 %v1363, %v1388
        %v1390 = vpop.f32.mrf.mxu0
        %1391 = vdwg.mxu0
        %v1392 = vtanh.pop %v1389
        %vm1393 = vcmask 253952
        %1394 = vst.msk [vmem:[%s576] sm:$0x1] %vm1393, %v1392
        %s1395 = sand.u32 %s428, 1
        %s1396 = scalar_lea.sflag [#allocation3], %s1395
        %s1397 = sand.u32 %s428, 1
        %s1398 = scalar_lea.vmem [#allocation2], %s1397
        // Predicated region
        $region93: #{bert_encoder_forward.1} parent=91 // pred_check
          %p1399 = pneg %p438
        $region94: #{bert_encoder_forward.1} parent=91 // pred_check_branch
          %1401 = sbr.rel (%p1399) target = $region96
        $region95: #{bert_encoder_forward.1} parent=91 // pred_region
          %1403 = vsyncadd %s1396, 0
          %s1404 = scalar_lea.hbm %s18, %s32
          %s1406 = sshll.u32 %s1398, 4
          %s1407 = int_to_ptr.vmem [resolvable:$true] %s1406
          %s1408 = sshll.u32 %s1404, 4
          %s1409 = int_to_ptr.hbm [resolvable:$true] %s1408
          %1411 = dma.vmem_to_hbm [thread:$0]  %s1407, 16, %s1409, %s1396
        $region96: #{bert_encoder_forward.1} parent=91 // pred_fallthru
          _
      $region92: #{bert_encoder_forward.1} parent=5 // pred_fallthru
        _
      %p1412 = scmp.le.s32.totalorder 2, %s27
      // Predicated region
      $region97: #{bert_encoder_forward.1} parent=5 // pred_check
        %p1413 = pneg %p1412
      $region98: #{bert_encoder_forward.1} parent=5 // pred_check_branch
        %1415 = sbr.rel (%p1413) target = $region100
      $region99: #{bert_encoder_forward.1} parent=5 // pred_region
        %s1416 = ssub.s32 %s27, 2
        // Predicated region
        $region101: #{bert_encoder_forward.1} parent=99 // pred_check
          %p1417 = pneg %p444
        $region102: #{bert_encoder_forward.1} parent=99 // pred_check_branch
          %1419 = sbr.rel (%p1417) target = $region104
        $region103: #{bert_encoder_forward.1} parent=99 // pred_region
          %s1420 = sand.u32 %s429, 1
          %s1421 = scalar_lea.sflag [#allocation3], %s1420
          %s1422 = sand.u32 %s429, 1
          %s1423 = scalar_lea.vmem [#allocation2], %s1422
          %1425 = dma.done %s1421, 16
        $region104: #{bert_encoder_forward.1} parent=99 // pred_fallthru
          _
      $region100: #{bert_encoder_forward.1} parent=5 // pred_fallthru
        _
    $region6: #{bert_encoder_forward.1} parent=1 // loop_footer
      %s31 = sadd.s32 1, %s27
    $region7: #{bert_encoder_forward.1} parent=1 // loop_footer_branch
      %26 = sbr.rel target = $region3
    $region8: #{bert_encoder_forward.1} parent=1 // loop_exit
      _
    %1426 = vsyncpa [#allocation3], 1
    %s1427 = scalar_lea.sflag [#allocation3], 1
    %1428 = vsyncpa %s1427, 1

</llo_original>
